<compile_context>
chip_gen: v6e
topology: v6e:2x2x1
jax: 0.10.0
libtpu: 0.0.40
codegen_flags: <defaults>
</compile_context>

<pallas_src>
import jax
import jax.numpy as jnp
import numpy as np
from jax import lax
from jax.experimental import pallas as pl
from jax.experimental.pallas import tpu as pltpu


# ----------------------------- Pallas kernel ------------------------------ #
def _decoder_kernel(
    x2_ref,      # (S*Bp, N)    time-major flattened, batch-padded inputs
    h0_ref,      # (Bp, Hp)     initial hidden state (batch/lane padded)
    wi_ref,      # (N, 3Hp)     fused input->gate weights  [r | z | n]
    wh_ref,      # (Hp, 3Hp)    fused hidden->gate weights [r | z | n]
    bi_ref,      # (1, 3Hp)     fused input-gate biases
    bh_ref,      # (1, 3Hp)     fused hidden-gate biases
    wout_ref,    # (Hp, Np)     output Linear weight^T, lane-padded to 128
    bout_ref,    # (1, Np)      output Linear bias, lane-padded to 128
    y_ref,       # (S*Bp, Np)   lane-dense output slab
    hn_ref,      # (Bp, Hp)     final hidden state
    gi_scr,      # VMEM (S*Bp, 3Hp)  hoisted input projections for all steps
    h_scr,       # VMEM (S*Bp, Hp)   hidden-state history for all steps
):
    SB, _ = x2_ref.shape
    Bp, Hp = h0_ref.shape
    S = SB // Bp

    # --- hoisted input-side projection: one batched matmul for all steps ---
    gi_scr[...] = (
        jnp.dot(x2_ref[...], wi_ref[...], preferred_element_type=jnp.float32)
        + bi_ref[...]
    )

    wh = wh_ref[...]          # hoisted: loaded once, resident across the loop
    bh = bh_ref[...]

    def step(t, h):
        row = pl.multiple_of(t * Bp, Bp)               # Bp is a multiple of 8
        gi_t = gi_scr[pl.ds(row, Bp), :]               # (Bp, 3Hp), aligned load
        gh = jnp.dot(h, wh, preferred_element_type=jnp.float32) + bh
        # PyTorch GRU cell, gate order [r, z, n]; every slice is a full
        # 128-lane-aligned block thanks to the Hp padding.
        r = jax.nn.sigmoid(gi_t[:, :Hp] + gh[:, :Hp])
        z = jax.nn.sigmoid(gi_t[:, Hp:2 * Hp] + gh[:, Hp:2 * Hp])
        n = jnp.tanh(gi_t[:, 2 * Hp:] + r * gh[:, 2 * Hp:])
        h_new = (1.0 - z) * n + z * h
        h_scr[pl.ds(row, Bp), :] = h_new               # aligned, unmasked store
        return h_new

    h_last = lax.fori_loop(
        0, S, step, h0_ref[...].astype(jnp.float32), unroll=(S <= 16)
    )

    # final hidden state written exactly once
    hn_ref[...] = h_last.astype(hn_ref.dtype)

    # --- batched output Linear over the whole sequence, lane-dense store ---
    y = (
        jnp.dot(h_scr[...], wout_ref[...], preferred_element_type=jnp.float32)
        + bout_ref[...]
    )
    y_ref[...] = y.astype(y_ref.dtype)


# ------------------------------ host wrapper ------------------------------ #
@jax.jit
def decoder_forward(x, h0, params):
    """x: (S, B, N), h0: (1, B, H). Returns (y (S,B,N), hidden_n (1,B,H))."""
    S, B, N = x.shape
    H = h0.shape[-1]

    (wir, wiz, win, whr, whz, whn,
     bir, biz, bin_, bhr, bhz, bhn, wout, bout) = params

    # Padded sizes: batch -> sublane multiple (8); hidden and output feature
    # widths -> full 128-lane tiles. Padded hidden columns stay exactly zero
    # through the GRU recurrence (zero weights/bias/initial state), so results
    # are bit-identical to the unpadded math.
    Bp = ((B + 7) // 8) * 8
    Hp = ((H + 127) // 128) * 128
    Np = ((N + 127) // 128) * 128

    pad_cols = lambda w: jnp.pad(w, ((0, 0), (0, Hp - H)))   # (X,H) -> (X,Hp)

    # Fuse gate weights / biases (PyTorch gate order [r, z, n]), each gate
    # occupying its own Hp-wide lane-aligned block.
    wi_cat = jnp.concatenate([pad_cols(wir), pad_cols(wiz), pad_cols(win)], axis=1)
    wh_cat = jnp.concatenate([pad_cols(whr), pad_cols(whz), pad_cols(whn)], axis=1)
    wh_cat = jnp.pad(wh_cat, ((0, Hp - H), (0, 0)))          # (Hp, 3Hp)
    bi_cat = jnp.concatenate([pad_cols(bir), pad_cols(biz), pad_cols(bin_)], axis=1)
    bh_cat = jnp.concatenate([pad_cols(bhr), pad_cols(bhz), pad_cols(bhn)], axis=1)

    x_p = jnp.pad(x.astype(jnp.float32), ((0, 0), (0, Bp - B), (0, 0)))
    x2 = x_p.reshape(S * Bp, N)                               # (S*Bp, N)
    h0_p = jnp.pad(h0[0].astype(jnp.float32), ((0, Bp - B), (0, Hp - H)))
    wout_p = jnp.pad(wout, ((0, Hp - H), (0, Np - N)))        # (Hp, Np)
    bout_p = jnp.pad(bout, ((0, 0), (0, Np - N)))             # (1, Np)

    vmem = pl.BlockSpec(memory_space=pltpu.MemorySpace.VMEM)

    y_p, hn_p = pl.pallas_call(
        _decoder_kernel,
        out_shape=(
            jax.ShapeDtypeStruct((S * Bp, Np), jnp.float32),
            jax.ShapeDtypeStruct((Bp, Hp), jnp.float32),
        ),
        in_specs=[vmem] * 8,
        out_specs=(vmem, vmem),
        scratch_shapes=[
            pltpu.VMEM((S * Bp, 3 * Hp), jnp.float32),   # hoisted input proj
            pltpu.VMEM((S * Bp, Hp), jnp.float32),       # hidden-state history
        ],
    )(x2, h0_p, wi_cat, wh_cat, bi_cat, bh_cat, wout_p, bout_p)

    y = y_p[:, :N].reshape(S, Bp, N)[:, :B, :].astype(x.dtype)
    hidden_n = hn_p[:B, :H][None, :, :].astype(x.dtype)
    return y, hidden_n


# ------------------------- pure-JAX reference (check) ---------------------- #
def decoder_reference(x, h0, params):
    (wir, wiz, win, whr, whz, whn,
     bir, biz, bin_, bhr, bhz, bhn, wout, bout) = params

    def step(h, x_t):
        r = jax.nn.sigmoid(x_t @ wir + bir + h @ whr + bhr)
        z = jax.nn.sigmoid(x_t @ wiz + biz + h @ whz + bhz)
        n = jnp.tanh(x_t @ win + bin_ + r * (h @ whn + bhn))
        h_new = (1.0 - z) * n + z * h
        y = h_new @ wout + bout
        return h_new, y

    h_last, ys = lax.scan(step, h0[0], x)
    return ys, h_last[None]


# --------------------------------- main ------------------------------------ #
if __name__ == "__main__":
    SEQ, BATCH, N_INPUT, HIDDEN = 8, 4, 16, 32

    key = jax.random.PRNGKey(0)
    keys = jax.random.split(key, 16)
    bound = 1.0 / np.sqrt(HIDDEN)
    u = lambda k, shp: jax.random.uniform(k, shp, jnp.float32, -bound, bound)

    # GRU parameters (PyTorch packs gates as [r, z, n]); stored pre-transposed.
    params = (
        u(keys[0], (N_INPUT, HIDDEN)),   # W_ir^T
        u(keys[1], (N_INPUT, HIDDEN)),   # W_iz^T
        u(keys[2], (N_INPUT, HIDDEN)),   # W_in^T
        u(keys[3], (HIDDEN, HIDDEN)),    # W_hr^T
        u(keys[4], (HIDDEN, HIDDEN)),    # W_hz^T
        u(keys[5], (HIDDEN, HIDDEN)),    # W_hn^T
        u(keys[6], (1, HIDDEN)),         # b_ir
        u(keys[7], (1, HIDDEN)),         # b_iz
        u(keys[8], (1, HIDDEN)),         # b_in
        u(keys[9], (1, HIDDEN)),         # b_hr
        u(keys[10], (1, HIDDEN)),        # b_hz
        u(keys[11], (1, HIDDEN)),        # b_hn
        u(keys[12], (HIDDEN, N_INPUT)),  # output_layer.weight^T
        u(keys[13], (1, N_INPUT)),       # output_layer.bias
    )

    x = jax.random.normal(keys[14], (SEQ, BATCH, N_INPUT), jnp.float32)
    h0 = jax.random.normal(keys[15], (1, BATCH, HIDDEN), jnp.float32)

    y, hn = decoder_forward(x, h0, params)
    jax.block_until_ready((y, hn))

    y_ref, hn_ref = decoder_reference(x, h0, params)
    np.testing.assert_allclose(np.asarray(y), np.asarray(y_ref), rtol=1e-5, atol=1e-5)
    np.testing.assert_allclose(np.asarray(hn), np.asarray(hn_ref), rtol=1e-5, atol=1e-5)

    print("KERNEL_OK")
</pallas_src>

<mosaic_0001>
module attributes {stable_mosaic.version = 11 : i64} {
  func.func @_decoder_kernel(%arg0: memref<64x16xf32, #tpu.memory_space<vmem>>, %arg1: memref<8x128xf32, #tpu.memory_space<vmem>>, %arg2: memref<16x384xf32, #tpu.memory_space<vmem>>, %arg3: memref<128x384xf32, #tpu.memory_space<vmem>>, %arg4: memref<1x384xf32, #tpu.memory_space<vmem>>, %arg5: memref<1x384xf32, #tpu.memory_space<vmem>>, %arg6: memref<128x128xf32, #tpu.memory_space<vmem>>, %arg7: memref<1x128xf32, #tpu.memory_space<vmem>>, %arg8: memref<64x128xf32, #tpu.memory_space<vmem>>, %arg9: memref<8x128xf32, #tpu.memory_space<vmem>>, %arg10: memref<64x384xf32, #tpu.memory_space<vmem>>, %arg11: memref<64x128xf32, #tpu.memory_space<vmem>>) attributes {dimension_semantics = [], scalar_prefetch = 0 : i64, scratch_operands = 2 : i64, tpu.core_type = #tpu.core_type<tc>} {
    %c0 = arith.constant 0 : index
    %c0_0 = arith.constant 0 : index
    %0 = vector.load %arg0[%c0, %c0_0] : memref<64x16xf32, #tpu.memory_space<vmem>>, vector<64x16xf32>
    %c0_1 = arith.constant 0 : index
    %c0_2 = arith.constant 0 : index
    %1 = vector.load %arg2[%c0_1, %c0_2] : memref<16x384xf32, #tpu.memory_space<vmem>>, vector<16x384xf32>
    %cst = arith.constant dense<0.000000e+00> : vector<64x384xf32>
    %2 = tpu.matmul %0, %1, %cst {dimension_numbers = #tpu.dot_dimension_numbers<[1], [0], [0], [1], [0, 0, 1, 1], [], []>} : vector<64x16xf32>, vector<16x384xf32>, vector<64x384xf32> -> vector<64x384xf32>
    %c0_3 = arith.constant 0 : index
    %c0_4 = arith.constant 0 : index
    %3 = vector.load %arg4[%c0_3, %c0_4] : memref<1x384xf32, #tpu.memory_space<vmem>>, vector<1x384xf32>
    %4 = vector.broadcast %3 : vector<1x384xf32> to vector<64x384xf32>
    %5 = arith.addf %2, %4 : vector<64x384xf32>
    %c0_5 = arith.constant 0 : index
    %c0_6 = arith.constant 0 : index
    %6 = vector.load %arg10[%c0_5, %c0_6] : memref<64x384xf32, #tpu.memory_space<vmem>>, vector<64x384xf32>
    tpu.vector_store %arg10[%c0_5, %c0_6], %5 {strides = array<i32>} : memref<64x384xf32, #tpu.memory_space<vmem>>, vector<64x384xf32>,
    %c0_7 = arith.constant 0 : index
    %c0_8 = arith.constant 0 : index
    %7 = vector.load %arg3[%c0_7, %c0_8] : memref<128x384xf32, #tpu.memory_space<vmem>>, vector<128x384xf32>
    %c0_9 = arith.constant 0 : index
    %c0_10 = arith.constant 0 : index
    %8 = vector.load %arg5[%c0_9, %c0_10] : memref<1x384xf32, #tpu.memory_space<vmem>>, vector<1x384xf32>
    %c0_11 = arith.constant 0 : index
    %c0_12 = arith.constant 0 : index
    %9 = vector.load %arg1[%c0_11, %c0_12] : memref<8x128xf32, #tpu.memory_space<vmem>>, vector<8x128xf32>
    %c0_i32 = arith.constant 0 : i32
    %c8_i32 = arith.constant 8 : i32
    %10 = arith.muli %c0_i32, %c8_i32 : i32
    %11 = tpu.assume_multiple %10, 8 : i32
    %12 = arith.index_cast %11 : i32 to index
    %c0_13 = arith.constant 0 : index
    %13 = vector.load %arg10[%12, %c0_13] : memref<64x384xf32, #tpu.memory_space<vmem>>, vector<8x384xf32>
    %cst_14 = arith.constant dense<0.000000e+00> : vector<8x384xf32>
    %14 = tpu.matmul %9, %7, %cst_14 {dimension_numbers = #tpu.dot_dimension_numbers<[1], [0], [0], [1], [0, 0, 1, 1], [], []>} : vector<8x128xf32>, vector<128x384xf32>, vector<8x384xf32> -> vector<8x384xf32>
    %15 = vector.broadcast %8 : vector<1x384xf32> to vector<8x384xf32>
    %16 = arith.addf %14, %15 : vector<8x384xf32>
    %17 = vector.extract_strided_slice %13 {offsets = [0, 0], sizes = [8, 128], strides = [1, 1]} : vector<8x384xf32> to vector<8x128xf32>
    %18 = vector.extract_strided_slice %16 {offsets = [0, 0], sizes = [8, 128], strides = [1, 1]} : vector<8x384xf32> to vector<8x128xf32>
    %19 = arith.addf %17, %18 : vector<8x128xf32>
    %20 = arith.negf %19 : vector<8x128xf32>
    %21 = math.exp %20 : vector<8x128xf32>
    %cst_15 = arith.constant 1.000000e+00 : f32
    %22 = vector.broadcast %cst_15 : f32 to vector<8x128xf32>
    %23 = arith.addf %22, %21 : vector<8x128xf32>
    %24 = arith.divf %22, %23 : vector<8x128xf32>
    %25 = vector.extract_strided_slice %13 {offsets = [0, 128], sizes = [8, 128], strides = [1, 1]} : vector<8x384xf32> to vector<8x128xf32>
    %26 = vector.extract_strided_slice %16 {offsets = [0, 128], sizes = [8, 128], strides = [1, 1]} : vector<8x384xf32> to vector<8x128xf32>
    %27 = arith.addf %25, %26 : vector<8x128xf32>
    %28 = arith.negf %27 : vector<8x128xf32>
    %29 = math.exp %28 : vector<8x128xf32>
    %cst_16 = arith.constant 1.000000e+00 : f32
    %30 = vector.broadcast %cst_16 : f32 to vector<8x128xf32>
    %31 = arith.addf %30, %29 : vector<8x128xf32>
    %32 = arith.divf %30, %31 : vector<8x128xf32>
    %33 = vector.extract_strided_slice %13 {offsets = [0, 256], sizes = [8, 128], strides = [1, 1]} : vector<8x384xf32> to vector<8x128xf32>
    %34 = vector.extract_strided_slice %16 {offsets = [0, 256], sizes = [8, 128], strides = [1, 1]} : vector<8x384xf32> to vector<8x128xf32>
    %35 = arith.mulf %24, %34 : vector<8x128xf32>
    %36 = arith.addf %33, %35 : vector<8x128xf32>
    %37 = math.tanh %36 : vector<8x128xf32>
    %cst_17 = arith.constant 1.000000e+00 : f32
    %38 = vector.broadcast %cst_17 : f32 to vector<8x128xf32>
    %39 = arith.subf %38, %32 : vector<8x128xf32>
    %40 = arith.mulf %39, %37 : vector<8x128xf32>
    %41 = arith.mulf %32, %9 : vector<8x128xf32>
    %42 = arith.addf %40, %41 : vector<8x128xf32>
    %43 = arith.index_cast %11 : i32 to index
    %c0_18 = arith.constant 0 : index
    %44 = vector.load %arg11[%43, %c0_18] : memref<64x128xf32, #tpu.memory_space<vmem>>, vector<8x128xf32>
    tpu.vector_store %arg11[%43, %c0_18], %42 {strides = array<i32>} : memref<64x128xf32, #tpu.memory_space<vmem>>, vector<8x128xf32>,
    %c1_i32 = arith.constant 1 : i32
    %c8_i32_19 = arith.constant 8 : i32
    %45 = arith.muli %c1_i32, %c8_i32_19 : i32
    %46 = tpu.assume_multiple %45, 8 : i32
    %47 = arith.index_cast %46 : i32 to index
    %c0_20 = arith.constant 0 : index
    %48 = vector.load %arg10[%47, %c0_20] : memref<64x384xf32, #tpu.memory_space<vmem>>, vector<8x384xf32>
    %cst_21 = arith.constant dense<0.000000e+00> : vector<8x384xf32>
    %49 = tpu.matmul %42, %7, %cst_21 {dimension_numbers = #tpu.dot_dimension_numbers<[1], [0], [0], [1], [0, 0, 1, 1], [], []>} : vector<8x128xf32>, vector<128x384xf32>, vector<8x384xf32> -> vector<8x384xf32>
    %50 = vector.broadcast %8 : vector<1x384xf32> to vector<8x384xf32>
    %51 = arith.addf %49, %50 : vector<8x384xf32>
    %52 = vector.extract_strided_slice %48 {offsets = [0, 0], sizes = [8, 128], strides = [1, 1]} : vector<8x384xf32> to vector<8x128xf32>
    %53 = vector.extract_strided_slice %51 {offsets = [0, 0], sizes = [8, 128], strides = [1, 1]} : vector<8x384xf32> to vector<8x128xf32>
    %54 = arith.addf %52, %53 : vector<8x128xf32>
    %55 = arith.negf %54 : vector<8x128xf32>
    %56 = math.exp %55 : vector<8x128xf32>
    %cst_22 = arith.constant 1.000000e+00 : f32
    %57 = vector.broadcast %cst_22 : f32 to vector<8x128xf32>
    %58 = arith.addf %57, %56 : vector<8x128xf32>
    %59 = arith.divf %57, %58 : vector<8x128xf32>
    %60 = vector.extract_strided_slice %48 {offsets = [0, 128], sizes = [8, 128], strides = [1, 1]} : vector<8x384xf32> to vector<8x128xf32>
    %61 = vector.extract_strided_slice %51 {offsets = [0, 128], sizes = [8, 128], strides = [1, 1]} : vector<8x384xf32> to vector<8x128xf32>
    %62 = arith.addf %60, %61 : vector<8x128xf32>
    %63 = arith.negf %62 : vector<8x128xf32>
    %64 = math.exp %63 : vector<8x128xf32>
    %cst_23 = arith.constant 1.000000e+00 : f32
    %65 = vector.broadcast %cst_23 : f32 to vector<8x128xf32>
    %66 = arith.addf %65, %64 : vector<8x128xf32>
    %67 = arith.divf %65, %66 : vector<8x128xf32>
    %68 = vector.extract_strided_slice %48 {offsets = [0, 256], sizes = [8, 128], strides = [1, 1]} : vector<8x384xf32> to vector<8x128xf32>
    %69 = vector.extract_strided_slice %51 {offsets = [0, 256], sizes = [8, 128], strides = [1, 1]} : vector<8x384xf32> to vector<8x128xf32>
    %70 = arith.mulf %59, %69 : vector<8x128xf32>
    %71 = arith.addf %68, %70 : vector<8x128xf32>
    %72 = math.tanh %71 : vector<8x128xf32>
    %cst_24 = arith.constant 1.000000e+00 : f32
    %73 = vector.broadcast %cst_24 : f32 to vector<8x128xf32>
    %74 = arith.subf %73, %67 : vector<8x128xf32>
    %75 = arith.mulf %74, %72 : vector<8x128xf32>
    %76 = arith.mulf %67, %42 : vector<8x128xf32>
    %77 = arith.addf %75, %76 : vector<8x128xf32>
    %78 = arith.index_cast %46 : i32 to index
    %c0_25 = arith.constant 0 : index
    %79 = vector.load %arg11[%78, %c0_25] : memref<64x128xf32, #tpu.memory_space<vmem>>, vector<8x128xf32>
    tpu.vector_store %arg11[%78, %c0_25], %77 {strides = array<i32>} : memref<64x128xf32, #tpu.memory_space<vmem>>, vector<8x128xf32>,
    %c2_i32 = arith.constant 2 : i32
    %c8_i32_26 = arith.constant 8 : i32
    %80 = arith.muli %c2_i32, %c8_i32_26 : i32
    %81 = tpu.assume_multiple %80, 8 : i32
    %82 = arith.index_cast %81 : i32 to index
    %c0_27 = arith.constant 0 : index
    %83 = vector.load %arg10[%82, %c0_27] : memref<64x384xf32, #tpu.memory_space<vmem>>, vector<8x384xf32>
    %cst_28 = arith.constant dense<0.000000e+00> : vector<8x384xf32>
    %84 = tpu.matmul %77, %7, %cst_28 {dimension_numbers = #tpu.dot_dimension_numbers<[1], [0], [0], [1], [0, 0, 1, 1], [], []>} : vector<8x128xf32>, vector<128x384xf32>, vector<8x384xf32> -> vector<8x384xf32>
    %85 = vector.broadcast %8 : vector<1x384xf32> to vector<8x384xf32>
    %86 = arith.addf %84, %85 : vector<8x384xf32>
    %87 = vector.extract_strided_slice %83 {offsets = [0, 0], sizes = [8, 128], strides = [1, 1]} : vector<8x384xf32> to vector<8x128xf32>
    %88 = vector.extract_strided_slice %86 {offsets = [0, 0], sizes = [8, 128], strides = [1, 1]} : vector<8x384xf32> to vector<8x128xf32>
    %89 = arith.addf %87, %88 : vector<8x128xf32>
    %90 = arith.negf %89 : vector<8x128xf32>
    %91 = math.exp %90 : vector<8x128xf32>
    %cst_29 = arith.constant 1.000000e+00 : f32
    %92 = vector.broadcast %cst_29 : f32 to vector<8x128xf32>
    %93 = arith.addf %92, %91 : vector<8x128xf32>
    %94 = arith.divf %92, %93 : vector<8x128xf32>
    %95 = vector.extract_strided_slice %83 {offsets = [0, 128], sizes = [8, 128], strides = [1, 1]} : vector<8x384xf32> to vector<8x128xf32>
    %96 = vector.extract_strided_slice %86 {offsets = [0, 128], sizes = [8, 128], strides = [1, 1]} : vector<8x384xf32> to vector<8x128xf32>
    %97 = arith.addf %95, %96 : vector<8x128xf32>
    %98 = arith.negf %97 : vector<8x128xf32>
    %99 = math.exp %98 : vector<8x128xf32>
    %cst_30 = arith.constant 1.000000e+00 : f32
    %100 = vector.broadcast %cst_30 : f32 to vector<8x128xf32>
    %101 = arith.addf %100, %99 : vector<8x128xf32>
    %102 = arith.divf %100, %101 : vector<8x128xf32>
    %103 = vector.extract_strided_slice %83 {offsets = [0, 256], sizes = [8, 128], strides = [1, 1]} : vector<8x384xf32> to vector<8x128xf32>
    %104 = vector.extract_strided_slice %86 {offsets = [0, 256], sizes = [8, 128], strides = [1, 1]} : vector<8x384xf32> to vector<8x128xf32>
    %105 = arith.mulf %94, %104 : vector<8x128xf32>
    %106 = arith.addf %103, %105 : vector<8x128xf32>
    %107 = math.tanh %106 : vector<8x128xf32>
    %cst_31 = arith.constant 1.000000e+00 : f32
    %108 = vector.broadcast %cst_31 : f32 to vector<8x128xf32>
    %109 = arith.subf %108, %102 : vector<8x128xf32>
    %110 = arith.mulf %109, %107 : vector<8x128xf32>
    %111 = arith.mulf %102, %77 : vector<8x128xf32>
    %112 = arith.addf %110, %111 : vector<8x128xf32>
    %113 = arith.index_cast %81 : i32 to index
    %c0_32 = arith.constant 0 : index
    %114 = vector.load %arg11[%113, %c0_32] : memref<64x128xf32, #tpu.memory_space<vmem>>, vector<8x128xf32>
    tpu.vector_store %arg11[%113, %c0_32], %112 {strides = array<i32>} : memref<64x128xf32, #tpu.memory_space<vmem>>, vector<8x128xf32>,
    %c3_i32 = arith.constant 3 : i32
    %c8_i32_33 = arith.constant 8 : i32
    %115 = arith.muli %c3_i32, %c8_i32_33 : i32
    %116 = tpu.assume_multiple %115, 8 : i32
    %117 = arith.index_cast %116 : i32 to index
    %c0_34 = arith.constant 0 : index
    %118 = vector.load %arg10[%117, %c0_34] : memref<64x384xf32, #tpu.memory_space<vmem>>, vector<8x384xf32>
    %cst_35 = arith.constant dense<0.000000e+00> : vector<8x384xf32>
    %119 = tpu.matmul %112, %7, %cst_35 {dimension_numbers = #tpu.dot_dimension_numbers<[1], [0], [0], [1], [0, 0, 1, 1], [], []>} : vector<8x128xf32>, vector<128x384xf32>, vector<8x384xf32> -> vector<8x384xf32>
    %120 = vector.broadcast %8 : vector<1x384xf32> to vector<8x384xf32>
    %121 = arith.addf %119, %120 : vector<8x384xf32>
    %122 = vector.extract_strided_slice %118 {offsets = [0, 0], sizes = [8, 128], strides = [1, 1]} : vector<8x384xf32> to vector<8x128xf32>
    %123 = vector.extract_strided_slice %121 {offsets = [0, 0], sizes = [8, 128], strides = [1, 1]} : vector<8x384xf32> to vector<8x128xf32>
    %124 = arith.addf %122, %123 : vector<8x128xf32>
    %125 = arith.negf %124 : vector<8x128xf32>
    %126 = math.exp %125 : vector<8x128xf32>
    %cst_36 = arith.constant 1.000000e+00 : f32
    %127 = vector.broadcast %cst_36 : f32 to vector<8x128xf32>
    %128 = arith.addf %127, %126 : vector<8x128xf32>
    %129 = arith.divf %127, %128 : vector<8x128xf32>
    %130 = vector.extract_strided_slice %118 {offsets = [0, 128], sizes = [8, 128], strides = [1, 1]} : vector<8x384xf32> to vector<8x128xf32>
    %131 = vector.extract_strided_slice %121 {offsets = [0, 128], sizes = [8, 128], strides = [1, 1]} : vector<8x384xf32> to vector<8x128xf32>
    %132 = arith.addf %130, %131 : vector<8x128xf32>
    %133 = arith.negf %132 : vector<8x128xf32>
    %134 = math.exp %133 : vector<8x128xf32>
    %cst_37 = arith.constant 1.000000e+00 : f32
    %135 = vector.broadcast %cst_37 : f32 to vector<8x128xf32>
    %136 = arith.addf %135, %134 : vector<8x128xf32>
    %137 = arith.divf %135, %136 : vector<8x128xf32>
    %138 = vector.extract_strided_slice %118 {offsets = [0, 256], sizes = [8, 128], strides = [1, 1]} : vector<8x384xf32> to vector<8x128xf32>
    %139 = vector.extract_strided_slice %121 {offsets = [0, 256], sizes = [8, 128], strides = [1, 1]} : vector<8x384xf32> to vector<8x128xf32>
    %140 = arith.mulf %129, %139 : vector<8x128xf32>
    %141 = arith.addf %138, %140 : vector<8x128xf32>
    %142 = math.tanh %141 : vector<8x128xf32>
    %cst_38 = arith.constant 1.000000e+00 : f32
    %143 = vector.broadcast %cst_38 : f32 to vector<8x128xf32>
    %144 = arith.subf %143, %137 : vector<8x128xf32>
    %145 = arith.mulf %144, %142 : vector<8x128xf32>
    %146 = arith.mulf %137, %112 : vector<8x128xf32>
    %147 = arith.addf %145, %146 : vector<8x128xf32>
    %148 = arith.index_cast %116 : i32 to index
    %c0_39 = arith.constant 0 : index
    %149 = vector.load %arg11[%148, %c0_39] : memref<64x128xf32, #tpu.memory_space<vmem>>, vector<8x128xf32>
    tpu.vector_store %arg11[%148, %c0_39], %147 {strides = array<i32>} : memref<64x128xf32, #tpu.memory_space<vmem>>, vector<8x128xf32>,
    %c4_i32 = arith.constant 4 : i32
    %c8_i32_40 = arith.constant 8 : i32
    %150 = arith.muli %c4_i32, %c8_i32_40 : i32
    %151 = tpu.assume_multiple %150, 8 : i32
    %152 = arith.index_cast %151 : i32 to index
    %c0_41 = arith.constant 0 : index
    %153 = vector.load %arg10[%152, %c0_41] : memref<64x384xf32, #tpu.memory_space<vmem>>, vector<8x384xf32>
    %cst_42 = arith.constant dense<0.000000e+00> : vector<8x384xf32>
    %154 = tpu.matmul %147, %7, %cst_42 {dimension_numbers = #tpu.dot_dimension_numbers<[1], [0], [0], [1], [0, 0, 1, 1], [], []>} : vector<8x128xf32>, vector<128x384xf32>, vector<8x384xf32> -> vector<8x384xf32>
    %155 = vector.broadcast %8 : vector<1x384xf32> to vector<8x384xf32>
    %156 = arith.addf %154, %155 : vector<8x384xf32>
    %157 = vector.extract_strided_slice %153 {offsets = [0, 0], sizes = [8, 128], strides = [1, 1]} : vector<8x384xf32> to vector<8x128xf32>
    %158 = vector.extract_strided_slice %156 {offsets = [0, 0], sizes = [8, 128], strides = [1, 1]} : vector<8x384xf32> to vector<8x128xf32>
    %159 = arith.addf %157, %158 : vector<8x128xf32>
    %160 = arith.negf %159 : vector<8x128xf32>
    %161 = math.exp %160 : vector<8x128xf32>
    %cst_43 = arith.constant 1.000000e+00 : f32
    %162 = vector.broadcast %cst_43 : f32 to vector<8x128xf32>
    %163 = arith.addf %162, %161 : vector<8x128xf32>
    %164 = arith.divf %162, %163 : vector<8x128xf32>
    %165 = vector.extract_strided_slice %153 {offsets = [0, 128], sizes = [8, 128], strides = [1, 1]} : vector<8x384xf32> to vector<8x128xf32>
    %166 = vector.extract_strided_slice %156 {offsets = [0, 128], sizes = [8, 128], strides = [1, 1]} : vector<8x384xf32> to vector<8x128xf32>
    %167 = arith.addf %165, %166 : vector<8x128xf32>
    %168 = arith.negf %167 : vector<8x128xf32>
    %169 = math.exp %168 : vector<8x128xf32>
    %cst_44 = arith.constant 1.000000e+00 : f32
    %170 = vector.broadcast %cst_44 : f32 to vector<8x128xf32>
    %171 = arith.addf %170, %169 : vector<8x128xf32>
    %172 = arith.divf %170, %171 : vector<8x128xf32>
    %173 = vector.extract_strided_slice %153 {offsets = [0, 256], sizes = [8, 128], strides = [1, 1]} : vector<8x384xf32> to vector<8x128xf32>
    %174 = vector.extract_strided_slice %156 {offsets = [0, 256], sizes = [8, 128], strides = [1, 1]} : vector<8x384xf32> to vector<8x128xf32>
    %175 = arith.mulf %164, %174 : vector<8x128xf32>
    %176 = arith.addf %173, %175 : vector<8x128xf32>
    %177 = math.tanh %176 : vector<8x128xf32>
    %cst_45 = arith.constant 1.000000e+00 : f32
    %178 = vector.broadcast %cst_45 : f32 to vector<8x128xf32>
    %179 = arith.subf %178, %172 : vector<8x128xf32>
    %180 = arith.mulf %179, %177 : vector<8x128xf32>
    %181 = arith.mulf %172, %147 : vector<8x128xf32>
    %182 = arith.addf %180, %181 : vector<8x128xf32>
    %183 = arith.index_cast %151 : i32 to index
    %c0_46 = arith.constant 0 : index
    %184 = vector.load %arg11[%183, %c0_46] : memref<64x128xf32, #tpu.memory_space<vmem>>, vector<8x128xf32>
    tpu.vector_store %arg11[%183, %c0_46], %182 {strides = array<i32>} : memref<64x128xf32, #tpu.memory_space<vmem>>, vector<8x128xf32>,
    %c5_i32 = arith.constant 5 : i32
    %c8_i32_47 = arith.constant 8 : i32
    %185 = arith.muli %c5_i32, %c8_i32_47 : i32
    %186 = tpu.assume_multiple %185, 8 : i32
    %187 = arith.index_cast %186 : i32 to index
    %c0_48 = arith.constant 0 : index
    %188 = vector.load %arg10[%187, %c0_48] : memref<64x384xf32, #tpu.memory_space<vmem>>, vector<8x384xf32>
    %cst_49 = arith.constant dense<0.000000e+00> : vector<8x384xf32>
    %189 = tpu.matmul %182, %7, %cst_49 {dimension_numbers = #tpu.dot_dimension_numbers<[1], [0], [0], [1], [0, 0, 1, 1], [], []>} : vector<8x128xf32>, vector<128x384xf32>, vector<8x384xf32> -> vector<8x384xf32>
    %190 = vector.broadcast %8 : vector<1x384xf32> to vector<8x384xf32>
    %191 = arith.addf %189, %190 : vector<8x384xf32>
    %192 = vector.extract_strided_slice %188 {offsets = [0, 0], sizes = [8, 128], strides = [1, 1]} : vector<8x384xf32> to vector<8x128xf32>
    %193 = vector.extract_strided_slice %191 {offsets = [0, 0], sizes = [8, 128], strides = [1, 1]} : vector<8x384xf32> to vector<8x128xf32>
    %194 = arith.addf %192, %193 : vector<8x128xf32>
    %195 = arith.negf %194 : vector<8x128xf32>
    %196 = math.exp %195 : vector<8x128xf32>
    %cst_50 = arith.constant 1.000000e+00 : f32
    %197 = vector.broadcast %cst_50 : f32 to vector<8x128xf32>
    %198 = arith.addf %197, %196 : vector<8x128xf32>
    %199 = arith.divf %197, %198 : vector<8x128xf32>
    %200 = vector.extract_strided_slice %188 {offsets = [0, 128], sizes = [8, 128], strides = [1, 1]} : vector<8x384xf32> to vector<8x128xf32>
    %201 = vector.extract_strided_slice %191 {offsets = [0, 128], sizes = [8, 128], strides = [1, 1]} : vector<8x384xf32> to vector<8x128xf32>
    %202 = arith.addf %200, %201 : vector<8x128xf32>
    %203 = arith.negf %202 : vector<8x128xf32>
    %204 = math.exp %203 : vector<8x128xf32>
    %cst_51 = arith.constant 1.000000e+00 : f32
    %205 = vector.broadcast %cst_51 : f32 to vector<8x128xf32>
    %206 = arith.addf %205, %204 : vector<8x128xf32>
    %207 = arith.divf %205, %206 : vector<8x128xf32>
    %208 = vector.extract_strided_slice %188 {offsets = [0, 256], sizes = [8, 128], strides = [1, 1]} : vector<8x384xf32> to vector<8x128xf32>
    %209 = vector.extract_strided_slice %191 {offsets = [0, 256], sizes = [8, 128], strides = [1, 1]} : vector<8x384xf32> to vector<8x128xf32>
    %210 = arith.mulf %199, %209 : vector<8x128xf32>
    %211 = arith.addf %208, %210 : vector<8x128xf32>
    %212 = math.tanh %211 : vector<8x128xf32>
    %cst_52 = arith.constant 1.000000e+00 : f32
    %213 = vector.broadcast %cst_52 : f32 to vector<8x128xf32>
    %214 = arith.subf %213, %207 : vector<8x128xf32>
    %215 = arith.mulf %214, %212 : vector<8x128xf32>
    %216 = arith.mulf %207, %182 : vector<8x128xf32>
    %217 = arith.addf %215, %216 : vector<8x128xf32>
    %218 = arith.index_cast %186 : i32 to index
    %c0_53 = arith.constant 0 : index
    %219 = vector.load %arg11[%218, %c0_53] : memref<64x128xf32, #tpu.memory_space<vmem>>, vector<8x128xf32>
    tpu.vector_store %arg11[%218, %c0_53], %217 {strides = array<i32>} : memref<64x128xf32, #tpu.memory_space<vmem>>, vector<8x128xf32>,
    %c6_i32 = arith.constant 6 : i32
    %c8_i32_54 = arith.constant 8 : i32
    %220 = arith.muli %c6_i32, %c8_i32_54 : i32
    %221 = tpu.assume_multiple %220, 8 : i32
    %222 = arith.index_cast %221 : i32 to index
    %c0_55 = arith.constant 0 : index
    %223 = vector.load %arg10[%222, %c0_55] : memref<64x384xf32, #tpu.memory_space<vmem>>, vector<8x384xf32>
    %cst_56 = arith.constant dense<0.000000e+00> : vector<8x384xf32>
    %224 = tpu.matmul %217, %7, %cst_56 {dimension_numbers = #tpu.dot_dimension_numbers<[1], [0], [0], [1], [0, 0, 1, 1], [], []>} : vector<8x128xf32>, vector<128x384xf32>, vector<8x384xf32> -> vector<8x384xf32>
    %225 = vector.broadcast %8 : vector<1x384xf32> to vector<8x384xf32>
    %226 = arith.addf %224, %225 : vector<8x384xf32>
    %227 = vector.extract_strided_slice %223 {offsets = [0, 0], sizes = [8, 128], strides = [1, 1]} : vector<8x384xf32> to vector<8x128xf32>
    %228 = vector.extract_strided_slice %226 {offsets = [0, 0], sizes = [8, 128], strides = [1, 1]} : vector<8x384xf32> to vector<8x128xf32>
    %229 = arith.addf %227, %228 : vector<8x128xf32>
    %230 = arith.negf %229 : vector<8x128xf32>
    %231 = math.exp %230 : vector<8x128xf32>
    %cst_57 = arith.constant 1.000000e+00 : f32
    %232 = vector.broadcast %cst_57 : f32 to vector<8x128xf32>
    %233 = arith.addf %232, %231 : vector<8x128xf32>
    %234 = arith.divf %232, %233 : vector<8x128xf32>
    %235 = vector.extract_strided_slice %223 {offsets = [0, 128], sizes = [8, 128], strides = [1, 1]} : vector<8x384xf32> to vector<8x128xf32>
    %236 = vector.extract_strided_slice %226 {offsets = [0, 128], sizes = [8, 128], strides = [1, 1]} : vector<8x384xf32> to vector<8x128xf32>
    %237 = arith.addf %235, %236 : vector<8x128xf32>
    %238 = arith.negf %237 : vector<8x128xf32>
    %239 = math.exp %238 : vector<8x128xf32>
    %cst_58 = arith.constant 1.000000e+00 : f32
    %240 = vector.broadcast %cst_58 : f32 to vector<8x128xf32>
    %241 = arith.addf %240, %239 : vector<8x128xf32>
    %242 = arith.divf %240, %241 : vector<8x128xf32>
    %243 = vector.extract_strided_slice %223 {offsets = [0, 256], sizes = [8, 128], strides = [1, 1]} : vector<8x384xf32> to vector<8x128xf32>
    %244 = vector.extract_strided_slice %226 {offsets = [0, 256], sizes = [8, 128], strides = [1, 1]} : vector<8x384xf32> to vector<8x128xf32>
    %245 = arith.mulf %234, %244 : vector<8x128xf32>
    %246 = arith.addf %243, %245 : vector<8x128xf32>
    %247 = math.tanh %246 : vector<8x128xf32>
    %cst_59 = arith.constant 1.000000e+00 : f32
    %248 = vector.broadcast %cst_59 : f32 to vector<8x128xf32>
    %249 = arith.subf %248, %242 : vector<8x128xf32>
    %250 = arith.mulf %249, %247 : vector<8x128xf32>
    %251 = arith.mulf %242, %217 : vector<8x128xf32>
    %252 = arith.addf %250, %251 : vector<8x128xf32>
    %253 = arith.index_cast %221 : i32 to index
    %c0_60 = arith.constant 0 : index
    %254 = vector.load %arg11[%253, %c0_60] : memref<64x128xf32, #tpu.memory_space<vmem>>, vector<8x128xf32>
    tpu.vector_store %arg11[%253, %c0_60], %252 {strides = array<i32>} : memref<64x128xf32, #tpu.memory_space<vmem>>, vector<8x128xf32>,
    %c7_i32 = arith.constant 7 : i32
    %c8_i32_61 = arith.constant 8 : i32
    %255 = arith.muli %c7_i32, %c8_i32_61 : i32
    %256 = tpu.assume_multiple %255, 8 : i32
    %257 = arith.index_cast %256 : i32 to index
    %c0_62 = arith.constant 0 : index
    %258 = vector.load %arg10[%257, %c0_62] : memref<64x384xf32, #tpu.memory_space<vmem>>, vector<8x384xf32>
    %cst_63 = arith.constant dense<0.000000e+00> : vector<8x384xf32>
    %259 = tpu.matmul %252, %7, %cst_63 {dimension_numbers = #tpu.dot_dimension_numbers<[1], [0], [0], [1], [0, 0, 1, 1], [], []>} : vector<8x128xf32>, vector<128x384xf32>, vector<8x384xf32> -> vector<8x384xf32>
    %260 = vector.broadcast %8 : vector<1x384xf32> to vector<8x384xf32>
    %261 = arith.addf %259, %260 : vector<8x384xf32>
    %262 = vector.extract_strided_slice %258 {offsets = [0, 0], sizes = [8, 128], strides = [1, 1]} : vector<8x384xf32> to vector<8x128xf32>
    %263 = vector.extract_strided_slice %261 {offsets = [0, 0], sizes = [8, 128], strides = [1, 1]} : vector<8x384xf32> to vector<8x128xf32>
    %264 = arith.addf %262, %263 : vector<8x128xf32>
    %265 = arith.negf %264 : vector<8x128xf32>
    %266 = math.exp %265 : vector<8x128xf32>
    %cst_64 = arith.constant 1.000000e+00 : f32
    %267 = vector.broadcast %cst_64 : f32 to vector<8x128xf32>
    %268 = arith.addf %267, %266 : vector<8x128xf32>
    %269 = arith.divf %267, %268 : vector<8x128xf32>
    %270 = vector.extract_strided_slice %258 {offsets = [0, 128], sizes = [8, 128], strides = [1, 1]} : vector<8x384xf32> to vector<8x128xf32>
    %271 = vector.extract_strided_slice %261 {offsets = [0, 128], sizes = [8, 128], strides = [1, 1]} : vector<8x384xf32> to vector<8x128xf32>
    %272 = arith.addf %270, %271 : vector<8x128xf32>
    %273 = arith.negf %272 : vector<8x128xf32>
    %274 = math.exp %273 : vector<8x128xf32>
    %cst_65 = arith.constant 1.000000e+00 : f32
    %275 = vector.broadcast %cst_65 : f32 to vector<8x128xf32>
    %276 = arith.addf %275, %274 : vector<8x128xf32>
    %277 = arith.divf %275, %276 : vector<8x128xf32>
    %278 = vector.extract_strided_slice %258 {offsets = [0, 256], sizes = [8, 128], strides = [1, 1]} : vector<8x384xf32> to vector<8x128xf32>
    %279 = vector.extract_strided_slice %261 {offsets = [0, 256], sizes = [8, 128], strides = [1, 1]} : vector<8x384xf32> to vector<8x128xf32>
    %280 = arith.mulf %269, %279 : vector<8x128xf32>
    %281 = arith.addf %278, %280 : vector<8x128xf32>
    %282 = math.tanh %281 : vector<8x128xf32>
    %cst_66 = arith.constant 1.000000e+00 : f32
    %283 = vector.broadcast %cst_66 : f32 to vector<8x128xf32>
    %284 = arith.subf %283, %277 : vector<8x128xf32>
    %285 = arith.mulf %284, %282 : vector<8x128xf32>
    %286 = arith.mulf %277, %252 : vector<8x128xf32>
    %287 = arith.addf %285, %286 : vector<8x128xf32>
    %288 = arith.index_cast %256 : i32 to index
    %c0_67 = arith.constant 0 : index
    %289 = vector.load %arg11[%288, %c0_67] : memref<64x128xf32, #tpu.memory_space<vmem>>, vector<8x128xf32>
    tpu.vector_store %arg11[%288, %c0_67], %287 {strides = array<i32>} : memref<64x128xf32, #tpu.memory_space<vmem>>, vector<8x128xf32>,
    %c8_i32_68 = arith.constant 8 : i32
    %c0_69 = arith.constant 0 : index
    %c0_70 = arith.constant 0 : index
    %290 = vector.load %arg9[%c0_69, %c0_70] : memref<8x128xf32, #tpu.memory_space<vmem>>, vector<8x128xf32>
    tpu.vector_store %arg9[%c0_69, %c0_70], %287 {strides = array<i32>} : memref<8x128xf32, #tpu.memory_space<vmem>>, vector<8x128xf32>,
    %c0_71 = arith.constant 0 : index
    %c0_72 = arith.constant 0 : index
    %291 = vector.load %arg11[%c0_71, %c0_72] : memref<64x128xf32, #tpu.memory_space<vmem>>, vector<64x128xf32>
    %c0_73 = arith.constant 0 : index
    %c0_74 = arith.constant 0 : index
    %292 = vector.load %arg6[%c0_73, %c0_74] : memref<128x128xf32, #tpu.memory_space<vmem>>, vector<128x128xf32>
    %cst_75 = arith.constant dense<0.000000e+00> : vector<64x128xf32>
    %293 = tpu.matmul %291, %292, %cst_75 {dimension_numbers = #tpu.dot_dimension_numbers<[1], [0], [0], [1], [0, 0, 1, 1], [], []>} : vector<64x128xf32>, vector<128x128xf32>, vector<64x128xf32> -> vector<64x128xf32>
    %c0_76 = arith.constant 0 : index
    %c0_77 = arith.constant 0 : index
    %294 = vector.load %arg7[%c0_76, %c0_77] : memref<1x128xf32, #tpu.memory_space<vmem>>, vector<1x128xf32>
    %295 = vector.broadcast %294 : vector<1x128xf32> to vector<64x128xf32>
    %296 = arith.addf %293, %295 : vector<64x128xf32>
    %c0_78 = arith.constant 0 : index
    %c0_79 = arith.constant 0 : index
    %297 = vector.load %arg8[%c0_78, %c0_79] : memref<64x128xf32, #tpu.memory_space<vmem>>, vector<64x128xf32>
    tpu.vector_store %arg8[%c0_78, %c0_79], %296 {strides = array<i32>} : memref<64x128xf32, #tpu.memory_space<vmem>>, vector<64x128xf32>,
    return
  }
}

</mosaic_0001>

<llo_original>
// kernel: decoder_forward.1
$region0: #{decoder_forward.1}
  #allocation0 [shape = 'u32[]', space=smem, size = 0x4, offset = 0x4, fixed_abs, tag = 'smem constant byte address 0x4 - core index']
  #allocation1 [shape = 'u32[144,128]{1,0:T(1,128)}', space=vmem, size = 0x12000, scoped, tag = 'internal scratch']
  #allocation2 [shape = 'f32[64,384]{1,0:T(8,128)}', space=vmem, size = 0x18000, scoped, tag = 'scratch operand']
  #allocation3 [shape = 'f32[64,128]{1,0:T(8,128)}', space=vmem, size = 0x8000, scoped, tag = 'scratch operand']
  %s0 = inlined_call_operand.vmem [shape: f32[64,16], index: 0, kind: input, shape index: {}]
  %s1 = inlined_call_operand.vmem [shape: f32[8,128], index: 1, kind: input, shape index: {}]
  %s2 = inlined_call_operand.vmem [shape: f32[16,384], index: 2, kind: input, shape index: {}]
  %s3 = inlined_call_operand.vmem [shape: f32[128,384], index: 3, kind: input, shape index: {}]
  %s4 = inlined_call_operand.vmem [shape: f32[1,384], index: 4, kind: input, shape index: {}]
  %s5 = inlined_call_operand.vmem [shape: f32[1,384], index: 5, kind: input, shape index: {}]
  %s6 = inlined_call_operand.vmem [shape: f32[128,128], index: 6, kind: input, shape index: {}]
  %s7 = inlined_call_operand.vmem [shape: f32[1,128], index: 7, kind: input, shape index: {}]
  %s8 = inlined_call_operand.vmem [shape: f32[64,128], index: 8, kind: output, shape index: {0}]
  %s9 = inlined_call_operand.vmem [shape: f32[8,128], index: 9, kind: output, shape index: {1}]
  %10 = xla_tuple %s8, %s9
  %s11 = sld [smem:[#allocation0]]
  $region50: #{decoder_forward.1} parent=0
    _
  %s13 = ssub.s32 1, %s11
  %s14 = scalar_select 0, %s13, %s11
  // Predicated region
  $region2: #{decoder_forward.1} parent=0 // pred_check
    _
  $region3: #{decoder_forward.1} parent=0 // pred_check_branch
    %16 = sbr.rel (0) target = $region5
  $region4: #{decoder_forward.1} parent=0 // pred_region
    _
  $region5: #{decoder_forward.1} parent=0 // pred_fallthru
    _
  // Predicated region
  $region6: #{decoder_forward.1} parent=0 // pred_check
    _
  $region7: #{decoder_forward.1} parent=0 // pred_check_branch
    %18 = sbr.rel (0) target = $region9
  $region8: #{decoder_forward.1} parent=0 // pred_region
    _
  $region9: #{decoder_forward.1} parent=0 // pred_fallthru
    _
  // Predicated region
  $region10: #{decoder_forward.1} parent=0 // pred_check
    _
  $region11: #{decoder_forward.1} parent=0 // pred_check_branch
    %20 = sbr.rel (0) target = $region13
  $region12: #{decoder_forward.1} parent=0 // pred_region
    _
  $region13: #{decoder_forward.1} parent=0 // pred_fallthru
    _
  // Predicated region
  $region14: #{decoder_forward.1} parent=0 // pred_check
    _
  $region15: #{decoder_forward.1} parent=0 // pred_check_branch
    %22 = sbr.rel (0) target = $region17
  $region16: #{decoder_forward.1} parent=0 // pred_region
    _
  $region17: #{decoder_forward.1} parent=0 // pred_fallthru
    _
  // Predicated region
  $region18: #{decoder_forward.1} parent=0 // pred_check
    _
  $region19: #{decoder_forward.1} parent=0 // pred_check_branch
    %24 = sbr.rel (0) target = $region21
  $region20: #{decoder_forward.1} parent=0 // pred_region
    _
  $region21: #{decoder_forward.1} parent=0 // pred_fallthru
    _
  // Predicated region
  $region22: #{decoder_forward.1} parent=0 // pred_check
    _
  $region23: #{decoder_forward.1} parent=0 // pred_check_branch
    %26 = sbr.rel (0) target = $region25
  $region24: #{decoder_forward.1} parent=0 // pred_region
    _
  $region25: #{decoder_forward.1} parent=0 // pred_fallthru
    _
  // Predicated region
  $region26: #{decoder_forward.1} parent=0 // pred_check
    _
  $region27: #{decoder_forward.1} parent=0 // pred_check_branch
    %28 = sbr.rel (0) target = $region29
  $region28: #{decoder_forward.1} parent=0 // pred_region
    _
  $region29: #{decoder_forward.1} parent=0 // pred_fallthru
    _
  // Predicated region
  $region30: #{decoder_forward.1} parent=0 // pred_check
    _
  $region31: #{decoder_forward.1} parent=0 // pred_check_branch
    %30 = sbr.rel (0) target = $region33
  $region32: #{decoder_forward.1} parent=0 // pred_region
    _
  $region33: #{decoder_forward.1} parent=0 // pred_fallthru
    _
  %v31 = vld [vmem:[%s0] sm:$0xff]
  %v32 = vld [vmem:[%s0 + $0x8] sm:$0xff]
  %v33 = vld [vmem:[%s0 + $0x10] sm:$0xff]
  %v34 = vld [vmem:[%s0 + $0x18] sm:$0xff]
  %v35 = vld [vmem:[%s0 + $0x20] sm:$0xff]
  %v36 = vld [vmem:[%s0 + $0x28] sm:$0xff]
  %v37 = vld [vmem:[%s0 + $0x30] sm:$0xff]
  %v38 = vld [vmem:[%s0 + $0x38] sm:$0xff]
  %v39 = vld [vmem:[%s2] sm:$0xff]
  %v40 = vld [vmem:[%s2 + $0x8] sm:$0xff]
  %v41 = vld [vmem:[%s2 + $0x10] sm:$0xff]
  %v42 = vld [vmem:[%s2 + $0x18] sm:$0xff]
  %v43 = vld [vmem:[%s2 + $0x20] sm:$0xff]
  %v44 = vld [vmem:[%s2 + $0x28] sm:$0xff]
  %v45 = vld [vmem:[%s4] sm:$0x7]
  %v47 = vlaneseq
  %v48 = vshrl.u32 %v47, 7
  %v49 = vsub.s32 0, %v48
  %v50 = vrot.slane %v45, %v49
  %v51 = vlaneseq
  %v52 = vshrl.u32 %v51, 7
  %v53 = vsub.s32 1, %v52
  %v54 = vrot.slane %v45, %v53
  %v55 = vlaneseq
  %v56 = vshrl.u32 %v55, 7
  %v57 = vsub.s32 2, %v56
  %v58 = vrot.slane %v45, %v57
  %vm62 = vcmask 130048
  %v64 = vsel %vm62, %v31, 0
  %v67 = vsel %vm62, %v32, 0
  %v70 = vsel %vm62, %v33, 0
  %v73 = vsel %vm62, %v34, 0
  %v76 = vsel %vm62, %v35, 0
  %v79 = vsel %vm62, %v36, 0
  %v82 = vsel %vm62, %v37, 0
  %v85 = vsel %vm62, %v38, 0
  %87 = vmatprep.subr.mxu0 0.0
  %88 = vmatpush1.msra.mxu0 0.0
  %89 = vmatprep.subr.mxu0 0.0
  %90 = vmatpush1.msra.mxu0 0.0
  %91 = vmatprep.subr.mxu0 0.0
  %92 = vmatpush1.msra.mxu0 0.0
  %93 = vmatprep.subr.mxu0 0.0
  %94 = vmatpush1.msra.mxu0 0.0
  %95 = vmatprep.subr.mxu0 0.0
  %96 = vmatpush1.msra.mxu0 0.0
  %97 = vmatprep.subr.mxu0 0.0
  %98 = vmatpush1.msra.mxu0 0.0
  %99 = vmatprep.subr.mxu0 0.0
  %100 = vmatpush1.msra.mxu0 0.0
  %101 = vmatprep.subr.mxu0 0.0
  %102 = vmatpush1.msra.mxu0 0.0
  %103 = vmatprep.subr.mxu0 0.0
  %104 = vmatpush1.msra.mxu0 0.0
  %105 = vmatprep.subr.mxu0 0.0
  %106 = vmatpush1.msra.mxu0 0.0
  %107 = vmatprep.subr.mxu0 0.0
  %108 = vmatpush1.msra.mxu0 0.0
  %109 = vmatprep.subr.mxu0 0.0
  %110 = vmatpush1.msra.mxu0 0.0
  %111 = vmatprep.subr.mxu0 0.0
  %112 = vmatpush1.msra.mxu0 0.0
  %113 = vmatprep.subr.mxu0 0.0
  %114 = vmatpush1.msra.mxu0 0.0
  %115 = vmatprep.subr.mxu0 %v43
  %116 = vmatpush1.msra.mxu0 %v42
  %117 = vmatprep.subr.mxu0 %v40
  %118 = vmatpush1.msra.mxu0 %v39
  %119 = vmatprep.subr.mxu0 0.0
  %120 = vmatpush2.msra.mxu0 0.0
  %121 = vmatprep.subr.mxu0 0.0
  %122 = vmatpush2.msra.mxu0 0.0
  %123 = vmatprep.subr.mxu0 0.0
  %124 = vmatpush2.msra.mxu0 0.0
  %125 = vmatprep.subr.mxu0 0.0
  %126 = vmatpush2.msra.mxu0 0.0
  %127 = vmatprep.subr.mxu0 0.0
  %128 = vmatpush2.msra.mxu0 0.0
  %129 = vmatprep.subr.mxu0 0.0
  %130 = vmatpush2.msra.mxu0 0.0
  %131 = vmatprep.subr.mxu0 0.0
  %132 = vmatpush2.msra.mxu0 0.0
  %133 = vmatprep.subr.mxu0 0.0
  %134 = vmatpush2.msra.mxu0 0.0
  %135 = vmatprep.subr.mxu0 0.0
  %136 = vmatpush2.msra.mxu0 0.0
  %137 = vmatprep.subr.mxu0 0.0
  %138 = vmatpush2.msra.mxu0 0.0
  %139 = vmatprep.subr.mxu0 0.0
  %140 = vmatpush2.msra.mxu0 0.0
  %141 = vmatprep.subr.mxu0 0.0
  %142 = vmatpush2.msra.mxu0 0.0
  %143 = vmatprep.subr.mxu0 0.0
  %144 = vmatpush2.msra.mxu0 0.0
  %145 = vmatprep.subr.mxu0 0.0
  %146 = vmatpush2.msra.mxu0 0.0
  %147 = vmatprep.subr.mxu0 0.0
  %148 = vmatpush2.msra.mxu0 0.0
  %149 = vmatprep.subr.mxu0 0.0
  %150 = vmatpush2.msra.mxu0 0.0
  %151 = vmatprep.mubr.f32.mxu0 0.0
  %152 = vmatmul.mubr.f32.gmra.mxu0 %v64
  %v153 = vpop.f32.mrf.mxu0
  %v154 = vadd.f32 %v50, %v153
  %v155 = vpop.f32.mrf.mxu0
  %v156 = vadd.f32 %v54, %v155
  %157 = vmatprep.mubr.f32.mxu0 0.0
  %158 = vmatmul.mubr.f32.gmra.mxu0 %v67
  %v159 = vpop.f32.mrf.mxu0
  %v160 = vadd.f32 %v50, %v159
  %v161 = vpop.f32.mrf.mxu0
  %v162 = vadd.f32 %v54, %v161
  %163 = vmatprep.mubr.f32.mxu0 0.0
  %164 = vmatmul.mubr.f32.gmra.mxu0 %v70
  %v165 = vpop.f32.mrf.mxu0
  %v166 = vadd.f32 %v50, %v165
  %v167 = vpop.f32.mrf.mxu0
  %v168 = vadd.f32 %v54, %v167
  %169 = vmatprep.mubr.f32.mxu0 0.0
  %170 = vmatmul.mubr.f32.gmra.mxu0 %v73
  %v171 = vpop.f32.mrf.mxu0
  %v172 = vadd.f32 %v50, %v171
  %v173 = vpop.f32.mrf.mxu0
  %v174 = vadd.f32 %v54, %v173
  %175 = vmatprep.mubr.f32.mxu0 0.0
  %176 = vmatmul.mubr.f32.gmra.mxu0 %v76
  %v177 = vpop.f32.mrf.mxu0
  %v178 = vadd.f32 %v50, %v177
  %v179 = vpop.f32.mrf.mxu0
  %v180 = vadd.f32 %v54, %v179
  %181 = vmatprep.mubr.f32.mxu0 0.0
  %182 = vmatmul.mubr.f32.gmra.mxu0 %v79
  %v183 = vpop.f32.mrf.mxu0
  %v184 = vadd.f32 %v50, %v183
  %v185 = vpop.f32.mrf.mxu0
  %v186 = vadd.f32 %v54, %v185
  %187 = vmatprep.mubr.f32.mxu0 0.0
  %188 = vmatmul.mubr.f32.gmra.mxu0 %v82
  %v189 = vpop.f32.mrf.mxu0
  %v190 = vadd.f32 %v50, %v189
  %v191 = vpop.f32.mrf.mxu0
  %v192 = vadd.f32 %v54, %v191
  %193 = vmatprep.mubr.f32.mxu0 0.0
  %194 = vmatmul.mubr.f32.gmra.mxu0 %v85
  %v195 = vpop.f32.mrf.mxu0
  %v196 = vadd.f32 %v50, %v195
  %v197 = vpop.f32.mrf.mxu0
  %v198 = vadd.f32 %v54, %v197
  %199 = vdwg.mxu0
  %200 = vmatprep.subr.mxu0 0.0
  %201 = vmatpush1.msra.mxu0 0.0
  %202 = vmatprep.subr.mxu0 0.0
  %203 = vmatpush1.msra.mxu0 0.0
  %204 = vmatprep.subr.mxu0 0.0
  %205 = vmatpush1.msra.mxu0 0.0
  %206 = vmatprep.subr.mxu0 0.0
  %207 = vmatpush1.msra.mxu0 0.0
  %208 = vmatprep.subr.mxu0 0.0
  %209 = vmatpush1.msra.mxu0 0.0
  %210 = vmatprep.subr.mxu0 0.0
  %211 = vmatpush1.msra.mxu0 0.0
  %212 = vmatprep.subr.mxu0 0.0
  %213 = vmatpush1.msra.mxu0 0.0
  %214 = vmatprep.subr.mxu0 0.0
  %215 = vmatpush1.msra.mxu0 0.0
  %216 = vmatprep.subr.mxu0 0.0
  %217 = vmatpush1.msra.mxu0 0.0
  %218 = vmatprep.subr.mxu0 0.0
  %219 = vmatpush1.msra.mxu0 0.0
  %220 = vmatprep.subr.mxu0 0.0
  %221 = vmatpush1.msra.mxu0 0.0
  %222 = vmatprep.subr.mxu0 0.0
  %223 = vmatpush1.msra.mxu0 0.0
  %224 = vmatprep.subr.mxu0 0.0
  %225 = vmatpush1.msra.mxu0 0.0
  %226 = vmatprep.subr.mxu0 0.0
  %227 = vmatpush1.msra.mxu0 0.0
  %228 = vmatprep.subr.mxu0 0.0
  %229 = vmatpush1.msra.mxu0 %v44
  %230 = vmatprep.subr.mxu0 0.0
  %231 = vmatpush1.msra.mxu0 %v41
  %232 = vmatprep.subr.mxu0 0.0
  %233 = vmatpush2.msra.mxu0 0.0
  %234 = vmatprep.subr.mxu0 0.0
  %235 = vmatpush2.msra.mxu0 0.0
  %236 = vmatprep.subr.mxu0 0.0
  %237 = vmatpush2.msra.mxu0 0.0
  %238 = vmatprep.subr.mxu0 0.0
  %239 = vmatpush2.msra.mxu0 0.0
  %240 = vmatprep.subr.mxu0 0.0
  %241 = vmatpush2.msra.mxu0 0.0
  %242 = vmatprep.subr.mxu0 0.0
  %243 = vmatpush2.msra.mxu0 0.0
  %244 = vmatprep.subr.mxu0 0.0
  %245 = vmatpush2.msra.mxu0 0.0
  %246 = vmatprep.subr.mxu0 0.0
  %247 = vmatpush2.msra.mxu0 0.0
  %248 = vmatprep.subr.mxu0 0.0
  %249 = vmatpush2.msra.mxu0 0.0
  %250 = vmatprep.subr.mxu0 0.0
  %251 = vmatpush2.msra.mxu0 0.0
  %252 = vmatprep.subr.mxu0 0.0
  %253 = vmatpush2.msra.mxu0 0.0
  %254 = vmatprep.subr.mxu0 0.0
  %255 = vmatpush2.msra.mxu0 0.0
  %256 = vmatprep.subr.mxu0 0.0
  %257 = vmatpush2.msra.mxu0 0.0
  %258 = vmatprep.subr.mxu0 0.0
  %259 = vmatpush2.msra.mxu0 0.0
  %260 = vmatprep.subr.mxu0 0.0
  %261 = vmatpush2.msra.mxu0 0.0
  %262 = vmatprep.subr.mxu0 0.0
  %263 = vmatpush2.msra.mxu0 0.0
  %264 = vmatprep.mubr.f32.mxu0 0.0
  %265 = vmatmul.mubr.f32.gmra.mxu0 %v64
  %v266 = vpop.f32.mrf.mxu0
  %v267 = vadd.f32 %v58, %v266
  %v268 = vpop.f32.mrf.mxu0
  %269 = vmatprep.mubr.f32.mxu0 0.0
  %270 = vmatmul.mubr.f32.gmra.mxu0 %v67
  %v271 = vpop.f32.mrf.mxu0
  %v272 = vadd.f32 %v58, %v271
  %v273 = vpop.f32.mrf.mxu0
  %274 = vmatprep.mubr.f32.mxu0 0.0
  %275 = vmatmul.mubr.f32.gmra.mxu0 %v70
  %v276 = vpop.f32.mrf.mxu0
  %v277 = vadd.f32 %v58, %v276
  %v278 = vpop.f32.mrf.mxu0
  %279 = vmatprep.mubr.f32.mxu0 0.0
  %280 = vmatmul.mubr.f32.gmra.mxu0 %v73
  %v281 = vpop.f32.mrf.mxu0
  %v282 = vadd.f32 %v58, %v281
  %v283 = vpop.f32.mrf.mxu0
  %284 = vmatprep.mubr.f32.mxu0 0.0
  %285 = vmatmul.mubr.f32.gmra.mxu0 %v76
  %v286 = vpop.f32.mrf.mxu0
  %v287 = vadd.f32 %v58, %v286
  %v288 = vpop.f32.mrf.mxu0
  %289 = vmatprep.mubr.f32.mxu0 0.0
  %290 = vmatmul.mubr.f32.gmra.mxu0 %v79
  %v291 = vpop.f32.mrf.mxu0
  %v292 = vadd.f32 %v58, %v291
  %v293 = vpop.f32.mrf.mxu0
  %294 = vmatprep.mubr.f32.mxu0 0.0
  %295 = vmatmul.mubr.f32.gmra.mxu0 %v82
  %v296 = vpop.f32.mrf.mxu0
  %v297 = vadd.f32 %v58, %v296
  %v298 = vpop.f32.mrf.mxu0
  %299 = vmatprep.mubr.f32.mxu0 0.0
  %300 = vmatmul.mubr.f32.gmra.mxu0 %v85
  %v301 = vpop.f32.mrf.mxu0
  %v302 = vadd.f32 %v58, %v301
  %v303 = vpop.f32.mrf.mxu0
  %304 = vdwg.mxu0
  %305 = vst [vmem:[#allocation2] sm:$0xff] %v154
  %306 = vst [vmem:[#allocation2 + $0x8] sm:$0xff] %v156
  %307 = vst [vmem:[#allocation2 + $0x10] sm:$0xff] %v267
  %308 = vst [vmem:[#allocation2 + $0x18] sm:$0xff] %v160
  %309 = vst [vmem:[#allocation2 + $0x20] sm:$0xff] %v162
  %310 = vst [vmem:[#allocation2 + $0x28] sm:$0xff] %v272
  %311 = vst [vmem:[#allocation2 + $0x30] sm:$0xff] %v166
  %312 = vst [vmem:[#allocation2 + $0x38] sm:$0xff] %v168
  %313 = vst [vmem:[#allocation2 + $0x40] sm:$0xff] %v277
  %314 = vst [vmem:[#allocation2 + $0x48] sm:$0xff] %v172
  %315 = vst [vmem:[#allocation2 + $0x50] sm:$0xff] %v174
  %316 = vst [vmem:[#allocation2 + $0x58] sm:$0xff] %v282
  %317 = vst [vmem:[#allocation2 + $0x60] sm:$0xff] %v178
  %318 = vst [vmem:[#allocation2 + $0x68] sm:$0xff] %v180
  %319 = vst [vmem:[#allocation2 + $0x70] sm:$0xff] %v287
  %320 = vst [vmem:[#allocation2 + $0x78] sm:$0xff] %v184
  %321 = vst [vmem:[#allocation2 + $0x80] sm:$0xff] %v186
  %322 = vst [vmem:[#allocation2 + $0x88] sm:$0xff] %v292
  %323 = vst [vmem:[#allocation2 + $0x90] sm:$0xff] %v190
  %324 = vst [vmem:[#allocation2 + $0x98] sm:$0xff] %v192
  %325 = vst [vmem:[#allocation2 + $0xa0] sm:$0xff] %v297
  %326 = vst [vmem:[#allocation2 + $0xa8] sm:$0xff] %v196
  %327 = vst [vmem:[#allocation2 + $0xb0] sm:$0xff] %v198
  %328 = vst [vmem:[#allocation2 + $0xb8] sm:$0xff] %v302
  %v329 = vld [vmem:[%s3] sm:$0xff]
  %v330 = vld [vmem:[%s3 + $0x8] sm:$0xff]
  %v331 = vld [vmem:[%s3 + $0x10] sm:$0xff]
  %v332 = vld [vmem:[%s3 + $0x18] sm:$0xff]
  %v333 = vld [vmem:[%s3 + $0x20] sm:$0xff]
  %v334 = vld [vmem:[%s3 + $0x28] sm:$0xff]
  %v335 = vld [vmem:[%s3 + $0x30] sm:$0xff]
  %v336 = vld [vmem:[%s3 + $0x38] sm:$0xff]
  %v337 = vld [vmem:[%s3 + $0x40] sm:$0xff]
  %v338 = vld [vmem:[%s3 + $0x48] sm:$0xff]
  %v339 = vld [vmem:[%s3 + $0x50] sm:$0xff]
  %v340 = vld [vmem:[%s3 + $0x58] sm:$0xff]
  %v341 = vld [vmem:[%s3 + $0x60] sm:$0xff]
  %v342 = vld [vmem:[%s3 + $0x68] sm:$0xff]
  %v343 = vld [vmem:[%s3 + $0x70] sm:$0xff]
  %v344 = vld [vmem:[%s3 + $0x78] sm:$0xff]
  %v345 = vld [vmem:[%s3 + $0x80] sm:$0xff]
  %v346 = vld [vmem:[%s3 + $0x88] sm:$0xff]
  %v347 = vld [vmem:[%s3 + $0x90] sm:$0xff]
  %v348 = vld [vmem:[%s3 + $0x98] sm:$0xff]
  %v349 = vld [vmem:[%s3 + $0xa0] sm:$0xff]
  %v350 = vld [vmem:[%s3 + $0xa8] sm:$0xff]
  %v351 = vld [vmem:[%s3 + $0xb0] sm:$0xff]
  %v352 = vld [vmem:[%s3 + $0xb8] sm:$0xff]
  %v353 = vld [vmem:[%s3 + $0xc0] sm:$0xff]
  %v354 = vld [vmem:[%s3 + $0xc8] sm:$0xff]
  %v355 = vld [vmem:[%s3 + $0xd0] sm:$0xff]
  %v356 = vld [vmem:[%s3 + $0xd8] sm:$0xff]
  %v357 = vld [vmem:[%s3 + $0xe0] sm:$0xff]
  %v358 = vld [vmem:[%s3 + $0xe8] sm:$0xff]
  %v359 = vld [vmem:[%s3 + $0xf0] sm:$0xff]
  %v360 = vld [vmem:[%s3 + $0xf8] sm:$0xff]
  %v361 = vld [vmem:[%s3 + $0x100] sm:$0xff]
  %v362 = vld [vmem:[%s3 + $0x108] sm:$0xff]
  %v363 = vld [vmem:[%s3 + $0x110] sm:$0xff]
  %v364 = vld [vmem:[%s3 + $0x118] sm:$0xff]
  %v365 = vld [vmem:[%s3 + $0x120] sm:$0xff]
  %v366 = vld [vmem:[%s3 + $0x128] sm:$0xff]
  %v367 = vld [vmem:[%s3 + $0x130] sm:$0xff]
  %v368 = vld [vmem:[%s3 + $0x138] sm:$0xff]
  %v369 = vld [vmem:[%s3 + $0x140] sm:$0xff]
  %v370 = vld [vmem:[%s3 + $0x148] sm:$0xff]
  %v371 = vld [vmem:[%s3 + $0x150] sm:$0xff]
  %v372 = vld [vmem:[%s3 + $0x158] sm:$0xff]
  %v373 = vld [vmem:[%s3 + $0x160] sm:$0xff]
  %v374 = vld [vmem:[%s3 + $0x168] sm:$0xff]
  %v375 = vld [vmem:[%s3 + $0x170] sm:$0xff]
  %v376 = vld [vmem:[%s3 + $0x178] sm:$0xff]
  %v377 = vld [vmem:[%s5] sm:$0x7]
  %v378 = vld [vmem:[%s1] sm:$0xff]
  %s379 = smul.u32 0, 3
  %s380 = smul.addr %s379, 8
  %s381 = scalar_lea.vmem [#allocation2], %s380
  %v382 = vld [vmem:[%s381] sm:$0xff]
  %v383 = vld [vmem:[%s381 + $0x8] sm:$0xff]
  %v384 = vld [vmem:[%s381 + $0x10] sm:$0xff]
  %v386 = vlaneseq
  %v387 = vshrl.u32 %v386, 7
  %v388 = vsub.s32 0, %v387
  %v389 = vrot.slane %v377, %v388
  %v390 = vlaneseq
  %v391 = vshrl.u32 %v390, 7
  %v392 = vsub.s32 1, %v391
  %v393 = vrot.slane %v377, %v392
  %v394 = vlaneseq
  %v395 = vshrl.u32 %v394, 7
  %v396 = vsub.s32 2, %v395
  %v397 = vrot.slane %v377, %v396
  %401 = vmatprep.subr.mxu0 %v375
  %402 = vmatpush1.msra.mxu0 %v374
  %403 = vmatprep.subr.mxu0 %v372
  %404 = vmatpush1.msra.mxu0 %v371
  %405 = vmatprep.subr.mxu0 %v369
  %406 = vmatpush1.msra.mxu0 %v368
  %407 = vmatprep.subr.mxu0 %v366
  %408 = vmatpush1.msra.mxu0 %v365
  %409 = vmatprep.subr.mxu0 %v363
  %410 = vmatpush1.msra.mxu0 %v362
  %411 = vmatprep.subr.mxu0 %v360
  %412 = vmatpush1.msra.mxu0 %v359
  %413 = vmatprep.subr.mxu0 %v357
  %414 = vmatpush1.msra.mxu0 %v356
  %415 = vmatprep.subr.mxu0 %v354
  %416 = vmatpush1.msra.mxu0 %v353
  %417 = vmatprep.subr.mxu0 %v351
  %418 = vmatpush1.msra.mxu0 %v350
  %419 = vmatprep.subr.mxu0 %v348
  %420 = vmatpush1.msra.mxu0 %v347
  %421 = vmatprep.subr.mxu0 %v345
  %422 = vmatpush1.msra.mxu0 %v344
  %423 = vmatprep.subr.mxu0 %v342
  %424 = vmatpush1.msra.mxu0 %v341
  %425 = vmatprep.subr.mxu0 %v339
  %426 = vmatpush1.msra.mxu0 %v338
  %427 = vmatprep.subr.mxu0 %v336
  %428 = vmatpush1.msra.mxu0 %v335
  %429 = vmatprep.subr.mxu0 %v333
  %430 = vmatpush1.msra.mxu0 %v332
  %431 = vmatprep.subr.mxu0 %v330
  %432 = vmatpush1.msra.mxu0 %v329
  %433 = vmatprep.subr.mxu0 0.0
  %434 = vmatpush2.msra.mxu0 0.0
  %435 = vmatprep.subr.mxu0 0.0
  %436 = vmatpush2.msra.mxu0 0.0
  %437 = vmatprep.subr.mxu0 0.0
  %438 = vmatpush2.msra.mxu0 0.0
  %439 = vmatprep.subr.mxu0 0.0
  %440 = vmatpush2.msra.mxu0 0.0
  %441 = vmatprep.subr.mxu0 0.0
  %442 = vmatpush2.msra.mxu0 0.0
  %443 = vmatprep.subr.mxu0 0.0
  %444 = vmatpush2.msra.mxu0 0.0
  %445 = vmatprep.subr.mxu0 0.0
  %446 = vmatpush2.msra.mxu0 0.0
  %447 = vmatprep.subr.mxu0 0.0
  %448 = vmatpush2.msra.mxu0 0.0
  %449 = vmatprep.subr.mxu0 0.0
  %450 = vmatpush2.msra.mxu0 0.0
  %451 = vmatprep.subr.mxu0 0.0
  %452 = vmatpush2.msra.mxu0 0.0
  %453 = vmatprep.subr.mxu0 0.0
  %454 = vmatpush2.msra.mxu0 0.0
  %455 = vmatprep.subr.mxu0 0.0
  %456 = vmatpush2.msra.mxu0 0.0
  %457 = vmatprep.subr.mxu0 0.0
  %458 = vmatpush2.msra.mxu0 0.0
  %459 = vmatprep.subr.mxu0 0.0
  %460 = vmatpush2.msra.mxu0 0.0
  %461 = vmatprep.subr.mxu0 0.0
  %462 = vmatpush2.msra.mxu0 0.0
  %463 = vmatprep.subr.mxu0 0.0
  %464 = vmatpush2.msra.mxu0 0.0
  %465 = vmatprep.mubr.f32.mxu0 0.0
  %466 = vmatmul.mubr.f32.gmra.mxu0 %v378
  %v467 = vpop.f32.mrf.mxu0
  %v468 = vadd.f32 %v389, %v467
  %v469 = vpop.f32.mrf.mxu0
  %v470 = vadd.f32 %v393, %v469
  %471 = vdwg.mxu0
  %472 = vmatprep.subr.mxu0 0.0
  %473 = vmatpush1.msra.mxu0 %v376
  %474 = vmatprep.subr.mxu0 0.0
  %475 = vmatpush1.msra.mxu0 %v373
  %476 = vmatprep.subr.mxu0 0.0
  %477 = vmatpush1.msra.mxu0 %v370
  %478 = vmatprep.subr.mxu0 0.0
  %479 = vmatpush1.msra.mxu0 %v367
  %480 = vmatprep.subr.mxu0 0.0
  %481 = vmatpush1.msra.mxu0 %v364
  %482 = vmatprep.subr.mxu0 0.0
  %483 = vmatpush1.msra.mxu0 %v361
  %484 = vmatprep.subr.mxu0 0.0
  %485 = vmatpush1.msra.mxu0 %v358
  %486 = vmatprep.subr.mxu0 0.0
  %487 = vmatpush1.msra.mxu0 %v355
  %488 = vmatprep.subr.mxu0 0.0
  %489 = vmatpush1.msra.mxu0 %v352
  %490 = vmatprep.subr.mxu0 0.0
  %491 = vmatpush1.msra.mxu0 %v349
  %492 = vmatprep.subr.mxu0 0.0
  %493 = vmatpush1.msra.mxu0 %v346
  %494 = vmatprep.subr.mxu0 0.0
  %495 = vmatpush1.msra.mxu0 %v343
  %496 = vmatprep.subr.mxu0 0.0
  %497 = vmatpush1.msra.mxu0 %v340
  %498 = vmatprep.subr.mxu0 0.0
  %499 = vmatpush1.msra.mxu0 %v337
  %500 = vmatprep.subr.mxu0 0.0
  %501 = vmatpush1.msra.mxu0 %v334
  %502 = vmatprep.subr.mxu0 0.0
  %503 = vmatpush1.msra.mxu0 %v331
  %504 = vmatprep.subr.mxu0 0.0
  %505 = vmatpush2.msra.mxu0 0.0
  %506 = vmatprep.subr.mxu0 0.0
  %507 = vmatpush2.msra.mxu0 0.0
  %508 = vmatprep.subr.mxu0 0.0
  %509 = vmatpush2.msra.mxu0 0.0
  %510 = vmatprep.subr.mxu0 0.0
  %511 = vmatpush2.msra.mxu0 0.0
  %512 = vmatprep.subr.mxu0 0.0
  %513 = vmatpush2.msra.mxu0 0.0
  %514 = vmatprep.subr.mxu0 0.0
  %515 = vmatpush2.msra.mxu0 0.0
  %516 = vmatprep.subr.mxu0 0.0
  %517 = vmatpush2.msra.mxu0 0.0
  %518 = vmatprep.subr.mxu0 0.0
  %519 = vmatpush2.msra.mxu0 0.0
  %520 = vmatprep.subr.mxu0 0.0
  %521 = vmatpush2.msra.mxu0 0.0
  %522 = vmatprep.subr.mxu0 0.0
  %523 = vmatpush2.msra.mxu0 0.0
  %524 = vmatprep.subr.mxu0 0.0
  %525 = vmatpush2.msra.mxu0 0.0
  %526 = vmatprep.subr.mxu0 0.0
  %527 = vmatpush2.msra.mxu0 0.0
  %528 = vmatprep.subr.mxu0 0.0
  %529 = vmatpush2.msra.mxu0 0.0
  %530 = vmatprep.subr.mxu0 0.0
  %531 = vmatpush2.msra.mxu0 0.0
  %532 = vmatprep.subr.mxu0 0.0
  %533 = vmatpush2.msra.mxu0 0.0
  %534 = vmatprep.subr.mxu0 0.0
  %535 = vmatpush2.msra.mxu0 0.0
  %536 = vmatprep.mubr.f32.mxu0 0.0
  %537 = vmatmul.mubr.f32.gmra.mxu0 %v378
  %v538 = vpop.f32.mrf.mxu0
  %v539 = vadd.f32 %v397, %v538
  %v540 = vpop.f32.mrf.mxu0
  %541 = vdwg.mxu0
  %v542 = vadd.f32 %v382, %v468
  %v543 = vxor.u32 %v542, 2147483648
  %v544 = vmul.f32 %v543, 1.442695
  %v545 = vpow.pop %v544
  %v546 = vadd.f32 %v545, 1.0
  %v547 = vrcp.pop %v546
  %v548 = vmul.f32 1.0, %v547
  %v549 = vadd.f32 %v383, %v470
  %v550 = vxor.u32 %v549, 2147483648
  %v551 = vmul.f32 %v550, 1.442695
  %v552 = vpow.pop %v551
  %v553 = vadd.f32 %v552, 1.0
  %v554 = vrcp.pop %v553
  %v555 = vmul.f32 1.0, %v554
  %v556 = vmul.f32 %v548, %v539
  %v557 = vadd.f32 %v384, %v556
  %v558 = vtanh.pop %v557
  %v559 = vsub.f32 1.0, %v555
  %v560 = vmul.f32 %v559, %v558
  %v561 = vmul.f32 %v555, %v378
  %v562 = vadd.f32 %v560, %v561
  %563 = vst [vmem:[#allocation3] sm:$0xff] %v562
  %s564 = smul.u32 1, 3
  %s565 = smul.addr %s564, 8
  %s566 = scalar_lea.vmem [#allocation2], %s565
  %v567 = vld [vmem:[%s566] sm:$0xff]
  %v568 = vld [vmem:[%s566 + $0x8] sm:$0xff]
  %v569 = vld [vmem:[%s566 + $0x10] sm:$0xff]
  %570 = vmatprep.subr.mxu0 %v375
  %571 = vmatpush1.msra.mxu0 %v374
  %572 = vmatprep.subr.mxu0 %v372
  %573 = vmatpush1.msra.mxu0 %v371
  %574 = vmatprep.subr.mxu0 %v369
  %575 = vmatpush1.msra.mxu0 %v368
  %576 = vmatprep.subr.mxu0 %v366
  %577 = vmatpush1.msra.mxu0 %v365
  %578 = vmatprep.subr.mxu0 %v363
  %579 = vmatpush1.msra.mxu0 %v362
  %580 = vmatprep.subr.mxu0 %v360
  %581 = vmatpush1.msra.mxu0 %v359
  %582 = vmatprep.subr.mxu0 %v357
  %583 = vmatpush1.msra.mxu0 %v356
  %584 = vmatprep.subr.mxu0 %v354
  %585 = vmatpush1.msra.mxu0 %v353
  %586 = vmatprep.subr.mxu0 %v351
  %587 = vmatpush1.msra.mxu0 %v350
  %588 = vmatprep.subr.mxu0 %v348
  %589 = vmatpush1.msra.mxu0 %v347
  %590 = vmatprep.subr.mxu0 %v345
  %591 = vmatpush1.msra.mxu0 %v344
  %592 = vmatprep.subr.mxu0 %v342
  %593 = vmatpush1.msra.mxu0 %v341
  %594 = vmatprep.subr.mxu0 %v339
  %595 = vmatpush1.msra.mxu0 %v338
  %596 = vmatprep.subr.mxu0 %v336
  %597 = vmatpush1.msra.mxu0 %v335
  %598 = vmatprep.subr.mxu0 %v333
  %599 = vmatpush1.msra.mxu0 %v332
  %600 = vmatprep.subr.mxu0 %v330
  %601 = vmatpush1.msra.mxu0 %v329
  %602 = vmatprep.subr.mxu0 0.0
  %603 = vmatpush2.msra.mxu0 0.0
  %604 = vmatprep.subr.mxu0 0.0
  %605 = vmatpush2.msra.mxu0 0.0
  %606 = vmatprep.subr.mxu0 0.0
  %607 = vmatpush2.msra.mxu0 0.0
  %608 = vmatprep.subr.mxu0 0.0
  %609 = vmatpush2.msra.mxu0 0.0
  %610 = vmatprep.subr.mxu0 0.0
  %611 = vmatpush2.msra.mxu0 0.0
  %612 = vmatprep.subr.mxu0 0.0
  %613 = vmatpush2.msra.mxu0 0.0
  %614 = vmatprep.subr.mxu0 0.0
  %615 = vmatpush2.msra.mxu0 0.0
  %616 = vmatprep.subr.mxu0 0.0
  %617 = vmatpush2.msra.mxu0 0.0
  %618 = vmatprep.subr.mxu0 0.0
  %619 = vmatpush2.msra.mxu0 0.0
  %620 = vmatprep.subr.mxu0 0.0
  %621 = vmatpush2.msra.mxu0 0.0
  %622 = vmatprep.subr.mxu0 0.0
  %623 = vmatpush2.msra.mxu0 0.0
  %624 = vmatprep.subr.mxu0 0.0
  %625 = vmatpush2.msra.mxu0 0.0
  %626 = vmatprep.subr.mxu0 0.0
  %627 = vmatpush2.msra.mxu0 0.0
  %628 = vmatprep.subr.mxu0 0.0
  %629 = vmatpush2.msra.mxu0 0.0
  %630 = vmatprep.subr.mxu0 0.0
  %631 = vmatpush2.msra.mxu0 0.0
  %632 = vmatprep.subr.mxu0 0.0
  %633 = vmatpush2.msra.mxu0 0.0
  %634 = vmatprep.mubr.f32.mxu0 0.0
  %635 = vmatmul.mubr.f32.gmra.mxu0 %v562
  %v636 = vpop.f32.mrf.mxu0
  %v637 = vadd.f32 %v389, %v636
  %v638 = vpop.f32.mrf.mxu0
  %v639 = vadd.f32 %v393, %v638
  %640 = vdwg.mxu0
  %641 = vmatprep.subr.mxu0 0.0
  %642 = vmatpush1.msra.mxu0 %v376
  %643 = vmatprep.subr.mxu0 0.0
  %644 = vmatpush1.msra.mxu0 %v373
  %645 = vmatprep.subr.mxu0 0.0
  %646 = vmatpush1.msra.mxu0 %v370
  %647 = vmatprep.subr.mxu0 0.0
  %648 = vmatpush1.msra.mxu0 %v367
  %649 = vmatprep.subr.mxu0 0.0
  %650 = vmatpush1.msra.mxu0 %v364
  %651 = vmatprep.subr.mxu0 0.0
  %652 = vmatpush1.msra.mxu0 %v361
  %653 = vmatprep.subr.mxu0 0.0
  %654 = vmatpush1.msra.mxu0 %v358
  %655 = vmatprep.subr.mxu0 0.0
  %656 = vmatpush1.msra.mxu0 %v355
  %657 = vmatprep.subr.mxu0 0.0
  %658 = vmatpush1.msra.mxu0 %v352
  %659 = vmatprep.subr.mxu0 0.0
  %660 = vmatpush1.msra.mxu0 %v349
  %661 = vmatprep.subr.mxu0 0.0
  %662 = vmatpush1.msra.mxu0 %v346
  %663 = vmatprep.subr.mxu0 0.0
  %664 = vmatpush1.msra.mxu0 %v343
  %665 = vmatprep.subr.mxu0 0.0
  %666 = vmatpush1.msra.mxu0 %v340
  %667 = vmatprep.subr.mxu0 0.0
  %668 = vmatpush1.msra.mxu0 %v337
  %669 = vmatprep.subr.mxu0 0.0
  %670 = vmatpush1.msra.mxu0 %v334
  %671 = vmatprep.subr.mxu0 0.0
  %672 = vmatpush1.msra.mxu0 %v331
  %673 = vmatprep.subr.mxu0 0.0
  %674 = vmatpush2.msra.mxu0 0.0
  %675 = vmatprep.subr.mxu0 0.0
  %676 = vmatpush2.msra.mxu0 0.0
  %677 = vmatprep.subr.mxu0 0.0
  %678 = vmatpush2.msra.mxu0 0.0
  %679 = vmatprep.subr.mxu0 0.0
  %680 = vmatpush2.msra.mxu0 0.0
  %681 = vmatprep.subr.mxu0 0.0
  %682 = vmatpush2.msra.mxu0 0.0
  %683 = vmatprep.subr.mxu0 0.0
  %684 = vmatpush2.msra.mxu0 0.0
  %685 = vmatprep.subr.mxu0 0.0
  %686 = vmatpush2.msra.mxu0 0.0
  %687 = vmatprep.subr.mxu0 0.0
  %688 = vmatpush2.msra.mxu0 0.0
  %689 = vmatprep.subr.mxu0 0.0
  %690 = vmatpush2.msra.mxu0 0.0
  %691 = vmatprep.subr.mxu0 0.0
  %692 = vmatpush2.msra.mxu0 0.0
  %693 = vmatprep.subr.mxu0 0.0
  %694 = vmatpush2.msra.mxu0 0.0
  %695 = vmatprep.subr.mxu0 0.0
  %696 = vmatpush2.msra.mxu0 0.0
  %697 = vmatprep.subr.mxu0 0.0
  %698 = vmatpush2.msra.mxu0 0.0
  %699 = vmatprep.subr.mxu0 0.0
  %700 = vmatpush2.msra.mxu0 0.0
  %701 = vmatprep.subr.mxu0 0.0
  %702 = vmatpush2.msra.mxu0 0.0
  %703 = vmatprep.subr.mxu0 0.0
  %704 = vmatpush2.msra.mxu0 0.0
  %705 = vmatprep.mubr.f32.mxu0 0.0
  %706 = vmatmul.mubr.f32.gmra.mxu0 %v562
  %v707 = vpop.f32.mrf.mxu0
  %v708 = vadd.f32 %v397, %v707
  %v709 = vpop.f32.mrf.mxu0
  %710 = vdwg.mxu0
  %v711 = vadd.f32 %v567, %v637
  %v712 = vxor.u32 %v711, 2147483648
  %v713 = vmul.f32 %v712, 1.442695
  %v714 = vpow.pop %v713
  %v715 = vadd.f32 %v714, 1.0
  %v716 = vrcp.pop %v715
  %v717 = vmul.f32 1.0, %v716
  %v718 = vadd.f32 %v568, %v639
  %v719 = vxor.u32 %v718, 2147483648
  %v720 = vmul.f32 %v719, 1.442695
  %v721 = vpow.pop %v720
  %v722 = vadd.f32 %v721, 1.0
  %v723 = vrcp.pop %v722
  %v724 = vmul.f32 1.0, %v723
  %v725 = vmul.f32 %v717, %v708
  %v726 = vadd.f32 %v569, %v725
  %v727 = vtanh.pop %v726
  %v728 = vsub.f32 1.0, %v724
  %v729 = vmul.f32 %v728, %v727
  %v730 = vmul.f32 %v724, %v562
  %v731 = vadd.f32 %v729, %v730
  %s732 = scalar_lea.vmem [#allocation3], 8
  %733 = vst [vmem:[%s732] sm:$0xff] %v731
  %s734 = smul.u32 2, 3
  %s735 = smul.addr %s734, 8
  %s736 = scalar_lea.vmem [#allocation2], %s735
  %v737 = vld [vmem:[%s736] sm:$0xff]
  %v738 = vld [vmem:[%s736 + $0x8] sm:$0xff]
  %v739 = vld [vmem:[%s736 + $0x10] sm:$0xff]
  %740 = vmatprep.subr.mxu0 %v375
  %741 = vmatpush1.msra.mxu0 %v374
  %742 = vmatprep.subr.mxu0 %v372
  %743 = vmatpush1.msra.mxu0 %v371
  %744 = vmatprep.subr.mxu0 %v369
  %745 = vmatpush1.msra.mxu0 %v368
  %746 = vmatprep.subr.mxu0 %v366
  %747 = vmatpush1.msra.mxu0 %v365
  %748 = vmatprep.subr.mxu0 %v363
  %749 = vmatpush1.msra.mxu0 %v362
  %750 = vmatprep.subr.mxu0 %v360
  %751 = vmatpush1.msra.mxu0 %v359
  %752 = vmatprep.subr.mxu0 %v357
  %753 = vmatpush1.msra.mxu0 %v356
  %754 = vmatprep.subr.mxu0 %v354
  %755 = vmatpush1.msra.mxu0 %v353
  %756 = vmatprep.subr.mxu0 %v351
  %757 = vmatpush1.msra.mxu0 %v350
  %758 = vmatprep.subr.mxu0 %v348
  %759 = vmatpush1.msra.mxu0 %v347
  %760 = vmatprep.subr.mxu0 %v345
  %761 = vmatpush1.msra.mxu0 %v344
  %762 = vmatprep.subr.mxu0 %v342
  %763 = vmatpush1.msra.mxu0 %v341
  %764 = vmatprep.subr.mxu0 %v339
  %765 = vmatpush1.msra.mxu0 %v338
  %766 = vmatprep.subr.mxu0 %v336
  %767 = vmatpush1.msra.mxu0 %v335
  %768 = vmatprep.subr.mxu0 %v333
  %769 = vmatpush1.msra.mxu0 %v332
  %770 = vmatprep.subr.mxu0 %v330
  %771 = vmatpush1.msra.mxu0 %v329
  %772 = vmatprep.subr.mxu0 0.0
  %773 = vmatpush2.msra.mxu0 0.0
  %774 = vmatprep.subr.mxu0 0.0
  %775 = vmatpush2.msra.mxu0 0.0
  %776 = vmatprep.subr.mxu0 0.0
  %777 = vmatpush2.msra.mxu0 0.0
  %778 = vmatprep.subr.mxu0 0.0
  %779 = vmatpush2.msra.mxu0 0.0
  %780 = vmatprep.subr.mxu0 0.0
  %781 = vmatpush2.msra.mxu0 0.0
  %782 = vmatprep.subr.mxu0 0.0
  %783 = vmatpush2.msra.mxu0 0.0
  %784 = vmatprep.subr.mxu0 0.0
  %785 = vmatpush2.msra.mxu0 0.0
  %786 = vmatprep.subr.mxu0 0.0
  %787 = vmatpush2.msra.mxu0 0.0
  %788 = vmatprep.subr.mxu0 0.0
  %789 = vmatpush2.msra.mxu0 0.0
  %790 = vmatprep.subr.mxu0 0.0
  %791 = vmatpush2.msra.mxu0 0.0
  %792 = vmatprep.subr.mxu0 0.0
  %793 = vmatpush2.msra.mxu0 0.0
  %794 = vmatprep.subr.mxu0 0.0
  %795 = vmatpush2.msra.mxu0 0.0
  %796 = vmatprep.subr.mxu0 0.0
  %797 = vmatpush2.msra.mxu0 0.0
  %798 = vmatprep.subr.mxu0 0.0
  %799 = vmatpush2.msra.mxu0 0.0
  %800 = vmatprep.subr.mxu0 0.0
  %801 = vmatpush2.msra.mxu0 0.0
  %802 = vmatprep.subr.mxu0 0.0
  %803 = vmatpush2.msra.mxu0 0.0
  %804 = vmatprep.mubr.f32.mxu0 0.0
  %805 = vmatmul.mubr.f32.gmra.mxu0 %v731
  %v806 = vpop.f32.mrf.mxu0
  %v807 = vadd.f32 %v389, %v806
  %v808 = vpop.f32.mrf.mxu0
  %v809 = vadd.f32 %v393, %v808
  %810 = vdwg.mxu0
  %811 = vmatprep.subr.mxu0 0.0
  %812 = vmatpush1.msra.mxu0 %v376
  %813 = vmatprep.subr.mxu0 0.0
  %814 = vmatpush1.msra.mxu0 %v373
  %815 = vmatprep.subr.mxu0 0.0
  %816 = vmatpush1.msra.mxu0 %v370
  %817 = vmatprep.subr.mxu0 0.0
  %818 = vmatpush1.msra.mxu0 %v367
  %819 = vmatprep.subr.mxu0 0.0
  %820 = vmatpush1.msra.mxu0 %v364
  %821 = vmatprep.subr.mxu0 0.0
  %822 = vmatpush1.msra.mxu0 %v361
  %823 = vmatprep.subr.mxu0 0.0
  %824 = vmatpush1.msra.mxu0 %v358
  %825 = vmatprep.subr.mxu0 0.0
  %826 = vmatpush1.msra.mxu0 %v355
  %827 = vmatprep.subr.mxu0 0.0
  %828 = vmatpush1.msra.mxu0 %v352
  %829 = vmatprep.subr.mxu0 0.0
  %830 = vmatpush1.msra.mxu0 %v349
  %831 = vmatprep.subr.mxu0 0.0
  %832 = vmatpush1.msra.mxu0 %v346
  %833 = vmatprep.subr.mxu0 0.0
  %834 = vmatpush1.msra.mxu0 %v343
  %835 = vmatprep.subr.mxu0 0.0
  %836 = vmatpush1.msra.mxu0 %v340
  %837 = vmatprep.subr.mxu0 0.0
  %838 = vmatpush1.msra.mxu0 %v337
  %839 = vmatprep.subr.mxu0 0.0
  %840 = vmatpush1.msra.mxu0 %v334
  %841 = vmatprep.subr.mxu0 0.0
  %842 = vmatpush1.msra.mxu0 %v331
  %843 = vmatprep.subr.mxu0 0.0
  %844 = vmatpush2.msra.mxu0 0.0
  %845 = vmatprep.subr.mxu0 0.0
  %846 = vmatpush2.msra.mxu0 0.0
  %847 = vmatprep.subr.mxu0 0.0
  %848 = vmatpush2.msra.mxu0 0.0
  %849 = vmatprep.subr.mxu0 0.0
  %850 = vmatpush2.msra.mxu0 0.0
  %851 = vmatprep.subr.mxu0 0.0
  %852 = vmatpush2.msra.mxu0 0.0
  %853 = vmatprep.subr.mxu0 0.0
  %854 = vmatpush2.msra.mxu0 0.0
  %855 = vmatprep.subr.mxu0 0.0
  %856 = vmatpush2.msra.mxu0 0.0
  %857 = vmatprep.subr.mxu0 0.0
  %858 = vmatpush2.msra.mxu0 0.0
  %859 = vmatprep.subr.mxu0 0.0
  %860 = vmatpush2.msra.mxu0 0.0
  %861 = vmatprep.subr.mxu0 0.0
  %862 = vmatpush2.msra.mxu0 0.0
  %863 = vmatprep.subr.mxu0 0.0
  %864 = vmatpush2.msra.mxu0 0.0
  %865 = vmatprep.subr.mxu0 0.0
  %866 = vmatpush2.msra.mxu0 0.0
  %867 = vmatprep.subr.mxu0 0.0
  %868 = vmatpush2.msra.mxu0 0.0
  %869 = vmatprep.subr.mxu0 0.0
  %870 = vmatpush2.msra.mxu0 0.0
  %871 = vmatprep.subr.mxu0 0.0
  %872 = vmatpush2.msra.mxu0 0.0
  %873 = vmatprep.subr.mxu0 0.0
  %874 = vmatpush2.msra.mxu0 0.0
  %875 = vmatprep.mubr.f32.mxu0 0.0
  %876 = vmatmul.mubr.f32.gmra.mxu0 %v731
  %v877 = vpop.f32.mrf.mxu0
  %v878 = vadd.f32 %v397, %v877
  %v879 = vpop.f32.mrf.mxu0
  %880 = vdwg.mxu0
  %v881 = vadd.f32 %v737, %v807
  %v882 = vxor.u32 %v881, 2147483648
  %v883 = vmul.f32 %v882, 1.442695
  %v884 = vpow.pop %v883
  %v885 = vadd.f32 %v884, 1.0
  %v886 = vrcp.pop %v885
  %v887 = vmul.f32 1.0, %v886
  %v888 = vadd.f32 %v738, %v809
  %v889 = vxor.u32 %v888, 2147483648
  %v890 = vmul.f32 %v889, 1.442695
  %v891 = vpow.pop %v890
  %v892 = vadd.f32 %v891, 1.0
  %v893 = vrcp.pop %v892
  %v894 = vmul.f32 1.0, %v893
  %v895 = vmul.f32 %v887, %v878
  %v896 = vadd.f32 %v739, %v895
  %v897 = vtanh.pop %v896
  %v898 = vsub.f32 1.0, %v894
  %v899 = vmul.f32 %v898, %v897
  %v900 = vmul.f32 %v894, %v731
  %v901 = vadd.f32 %v899, %v900
  %s902 = scalar_lea.vmem [#allocation3], 16
  %903 = vst [vmem:[%s902] sm:$0xff] %v901
  %s904 = smul.u32 3, 3
  %s905 = smul.addr %s904, 8
  %s906 = scalar_lea.vmem [#allocation2], %s905
  %v907 = vld [vmem:[%s906] sm:$0xff]
  %v908 = vld [vmem:[%s906 + $0x8] sm:$0xff]
  %v909 = vld [vmem:[%s906 + $0x10] sm:$0xff]
  %910 = vmatprep.subr.mxu0 %v375
  %911 = vmatpush1.msra.mxu0 %v374
  %912 = vmatprep.subr.mxu0 %v372
  %913 = vmatpush1.msra.mxu0 %v371
  %914 = vmatprep.subr.mxu0 %v369
  %915 = vmatpush1.msra.mxu0 %v368
  %916 = vmatprep.subr.mxu0 %v366
  %917 = vmatpush1.msra.mxu0 %v365
  %918 = vmatprep.subr.mxu0 %v363
  %919 = vmatpush1.msra.mxu0 %v362
  %920 = vmatprep.subr.mxu0 %v360
  %921 = vmatpush1.msra.mxu0 %v359
  %922 = vmatprep.subr.mxu0 %v357
  %923 = vmatpush1.msra.mxu0 %v356
  %924 = vmatprep.subr.mxu0 %v354
  %925 = vmatpush1.msra.mxu0 %v353
  %926 = vmatprep.subr.mxu0 %v351
  %927 = vmatpush1.msra.mxu0 %v350
  %928 = vmatprep.subr.mxu0 %v348
  %929 = vmatpush1.msra.mxu0 %v347
  %930 = vmatprep.subr.mxu0 %v345
  %931 = vmatpush1.msra.mxu0 %v344
  %932 = vmatprep.subr.mxu0 %v342
  %933 = vmatpush1.msra.mxu0 %v341
  %934 = vmatprep.subr.mxu0 %v339
  %935 = vmatpush1.msra.mxu0 %v338
  %936 = vmatprep.subr.mxu0 %v336
  %937 = vmatpush1.msra.mxu0 %v335
  %938 = vmatprep.subr.mxu0 %v333
  %939 = vmatpush1.msra.mxu0 %v332
  %940 = vmatprep.subr.mxu0 %v330
  %941 = vmatpush1.msra.mxu0 %v329
  %942 = vmatprep.subr.mxu0 0.0
  %943 = vmatpush2.msra.mxu0 0.0
  %944 = vmatprep.subr.mxu0 0.0
  %945 = vmatpush2.msra.mxu0 0.0
  %946 = vmatprep.subr.mxu0 0.0
  %947 = vmatpush2.msra.mxu0 0.0
  %948 = vmatprep.subr.mxu0 0.0
  %949 = vmatpush2.msra.mxu0 0.0
  %950 = vmatprep.subr.mxu0 0.0
  %951 = vmatpush2.msra.mxu0 0.0
  %952 = vmatprep.subr.mxu0 0.0
  %953 = vmatpush2.msra.mxu0 0.0
  %954 = vmatprep.subr.mxu0 0.0
  %955 = vmatpush2.msra.mxu0 0.0
  %956 = vmatprep.subr.mxu0 0.0
  %957 = vmatpush2.msra.mxu0 0.0
  %958 = vmatprep.subr.mxu0 0.0
  %959 = vmatpush2.msra.mxu0 0.0
  %960 = vmatprep.subr.mxu0 0.0
  %961 = vmatpush2.msra.mxu0 0.0
  %962 = vmatprep.subr.mxu0 0.0
  %963 = vmatpush2.msra.mxu0 0.0
  %964 = vmatprep.subr.mxu0 0.0
  %965 = vmatpush2.msra.mxu0 0.0
  %966 = vmatprep.subr.mxu0 0.0
  %967 = vmatpush2.msra.mxu0 0.0
  %968 = vmatprep.subr.mxu0 0.0
  %969 = vmatpush2.msra.mxu0 0.0
  %970 = vmatprep.subr.mxu0 0.0
  %971 = vmatpush2.msra.mxu0 0.0
  %972 = vmatprep.subr.mxu0 0.0
  %973 = vmatpush2.msra.mxu0 0.0
  %974 = vmatprep.mubr.f32.mxu0 0.0
  %975 = vmatmul.mubr.f32.gmra.mxu0 %v901
  %v976 = vpop.f32.mrf.mxu0
  %v977 = vadd.f32 %v389, %v976
  %v978 = vpop.f32.mrf.mxu0
  %v979 = vadd.f32 %v393, %v978
  %980 = vdwg.mxu0
  %981 = vmatprep.subr.mxu0 0.0
  %982 = vmatpush1.msra.mxu0 %v376
  %983 = vmatprep.subr.mxu0 0.0
  %984 = vmatpush1.msra.mxu0 %v373
  %985 = vmatprep.subr.mxu0 0.0
  %986 = vmatpush1.msra.mxu0 %v370
  %987 = vmatprep.subr.mxu0 0.0
  %988 = vmatpush1.msra.mxu0 %v367
  %989 = vmatprep.subr.mxu0 0.0
  %990 = vmatpush1.msra.mxu0 %v364
  %991 = vmatprep.subr.mxu0 0.0
  %992 = vmatpush1.msra.mxu0 %v361
  %993 = vmatprep.subr.mxu0 0.0
  %994 = vmatpush1.msra.mxu0 %v358
  %995 = vmatprep.subr.mxu0 0.0
  %996 = vmatpush1.msra.mxu0 %v355
  %997 = vmatprep.subr.mxu0 0.0
  %998 = vmatpush1.msra.mxu0 %v352
  %999 = vmatprep.subr.mxu0 0.0
  %1000 = vmatpush1.msra.mxu0 %v349
  %1001 = vmatprep.subr.mxu0 0.0
  %1002 = vmatpush1.msra.mxu0 %v346
  %1003 = vmatprep.subr.mxu0 0.0
  %1004 = vmatpush1.msra.mxu0 %v343
  %1005 = vmatprep.subr.mxu0 0.0
  %1006 = vmatpush1.msra.mxu0 %v340
  %1007 = vmatprep.subr.mxu0 0.0
  %1008 = vmatpush1.msra.mxu0 %v337
  %1009 = vmatprep.subr.mxu0 0.0
  %1010 = vmatpush1.msra.mxu0 %v334
  %1011 = vmatprep.subr.mxu0 0.0
  %1012 = vmatpush1.msra.mxu0 %v331
  %1013 = vmatprep.subr.mxu0 0.0
  %1014 = vmatpush2.msra.mxu0 0.0
  %1015 = vmatprep.subr.mxu0 0.0
  %1016 = vmatpush2.msra.mxu0 0.0
  %1017 = vmatprep.subr.mxu0 0.0
  %1018 = vmatpush2.msra.mxu0 0.0
  %1019 = vmatprep.subr.mxu0 0.0
  %1020 = vmatpush2.msra.mxu0 0.0
  %1021 = vmatprep.subr.mxu0 0.0
  %1022 = vmatpush2.msra.mxu0 0.0
  %1023 = vmatprep.subr.mxu0 0.0
  %1024 = vmatpush2.msra.mxu0 0.0
  %1025 = vmatprep.subr.mxu0 0.0
  %1026 = vmatpush2.msra.mxu0 0.0
  %1027 = vmatprep.subr.mxu0 0.0
  %1028 = vmatpush2.msra.mxu0 0.0
  %1029 = vmatprep.subr.mxu0 0.0
  %1030 = vmatpush2.msra.mxu0 0.0
  %1031 = vmatprep.subr.mxu0 0.0
  %1032 = vmatpush2.msra.mxu0 0.0
  %1033 = vmatprep.subr.mxu0 0.0
  %1034 = vmatpush2.msra.mxu0 0.0
  %1035 = vmatprep.subr.mxu0 0.0
  %1036 = vmatpush2.msra.mxu0 0.0
  %1037 = vmatprep.subr.mxu0 0.0
  %1038 = vmatpush2.msra.mxu0 0.0
  %1039 = vmatprep.subr.mxu0 0.0
  %1040 = vmatpush2.msra.mxu0 0.0
  %1041 = vmatprep.subr.mxu0 0.0
  %1042 = vmatpush2.msra.mxu0 0.0
  %1043 = vmatprep.subr.mxu0 0.0
  %1044 = vmatpush2.msra.mxu0 0.0
  %1045 = vmatprep.mubr.f32.mxu0 0.0
  %1046 = vmatmul.mubr.f32.gmra.mxu0 %v901
  %v1047 = vpop.f32.mrf.mxu0
  %v1048 = vadd.f32 %v397, %v1047
  %v1049 = vpop.f32.mrf.mxu0
  %1050 = vdwg.mxu0
  %v1051 = vadd.f32 %v907, %v977
  %v1052 = vxor.u32 %v1051, 2147483648
  %v1053 = vmul.f32 %v1052, 1.442695
  %v1054 = vpow.pop %v1053
  %v1055 = vadd.f32 %v1054, 1.0
  %v1056 = vrcp.pop %v1055
  %v1057 = vmul.f32 1.0, %v1056
  %v1058 = vadd.f32 %v908, %v979
  %v1059 = vxor.u32 %v1058, 2147483648
  %v1060 = vmul.f32 %v1059, 1.442695
  %v1061 = vpow.pop %v1060
  %v1062 = vadd.f32 %v1061, 1.0
  %v1063 = vrcp.pop %v1062
  %v1064 = vmul.f32 1.0, %v1063
  %v1065 = vmul.f32 %v1057, %v1048
  %v1066 = vadd.f32 %v909, %v1065
  %v1067 = vtanh.pop %v1066
  %v1068 = vsub.f32 1.0, %v1064
  %v1069 = vmul.f32 %v1068, %v1067
  %v1070 = vmul.f32 %v1064, %v901
  %v1071 = vadd.f32 %v1069, %v1070
  %s1072 = scalar_lea.vmem [#allocation3], 24
  %1073 = vst [vmem:[%s1072] sm:$0xff] %v1071
  %s1074 = smul.u32 4, 3
  %s1075 = smul.addr %s1074, 8
  %s1076 = scalar_lea.vmem [#allocation2], %s1075
  %v1077 = vld [vmem:[%s1076] sm:$0xff]
  %v1078 = vld [vmem:[%s1076 + $0x8] sm:$0xff]
  %v1079 = vld [vmem:[%s1076 + $0x10] sm:$0xff]
  %1080 = vmatprep.subr.mxu0 %v375
  %1081 = vmatpush1.msra.mxu0 %v374
  %1082 = vmatprep.subr.mxu0 %v372
  %1083 = vmatpush1.msra.mxu0 %v371
  %1084 = vmatprep.subr.mxu0 %v369
  %1085 = vmatpush1.msra.mxu0 %v368
  %1086 = vmatprep.subr.mxu0 %v366
  %1087 = vmatpush1.msra.mxu0 %v365
  %1088 = vmatprep.subr.mxu0 %v363
  %1089 = vmatpush1.msra.mxu0 %v362
  %1090 = vmatprep.subr.mxu0 %v360
  %1091 = vmatpush1.msra.mxu0 %v359
  %1092 = vmatprep.subr.mxu0 %v357
  %1093 = vmatpush1.msra.mxu0 %v356
  %1094 = vmatprep.subr.mxu0 %v354
  %1095 = vmatpush1.msra.mxu0 %v353
  %1096 = vmatprep.subr.mxu0 %v351
  %1097 = vmatpush1.msra.mxu0 %v350
  %1098 = vmatprep.subr.mxu0 %v348
  %1099 = vmatpush1.msra.mxu0 %v347
  %1100 = vmatprep.subr.mxu0 %v345
  %1101 = vmatpush1.msra.mxu0 %v344
  %1102 = vmatprep.subr.mxu0 %v342
  %1103 = vmatpush1.msra.mxu0 %v341
  %1104 = vmatprep.subr.mxu0 %v339
  %1105 = vmatpush1.msra.mxu0 %v338
  %1106 = vmatprep.subr.mxu0 %v336
  %1107 = vmatpush1.msra.mxu0 %v335
  %1108 = vmatprep.subr.mxu0 %v333
  %1109 = vmatpush1.msra.mxu0 %v332
  %1110 = vmatprep.subr.mxu0 %v330
  %1111 = vmatpush1.msra.mxu0 %v329
  %1112 = vmatprep.subr.mxu0 0.0
  %1113 = vmatpush2.msra.mxu0 0.0
  %1114 = vmatprep.subr.mxu0 0.0
  %1115 = vmatpush2.msra.mxu0 0.0
  %1116 = vmatprep.subr.mxu0 0.0
  %1117 = vmatpush2.msra.mxu0 0.0
  %1118 = vmatprep.subr.mxu0 0.0
  %1119 = vmatpush2.msra.mxu0 0.0
  %1120 = vmatprep.subr.mxu0 0.0
  %1121 = vmatpush2.msra.mxu0 0.0
  %1122 = vmatprep.subr.mxu0 0.0
  %1123 = vmatpush2.msra.mxu0 0.0
  %1124 = vmatprep.subr.mxu0 0.0
  %1125 = vmatpush2.msra.mxu0 0.0
  %1126 = vmatprep.subr.mxu0 0.0
  %1127 = vmatpush2.msra.mxu0 0.0
  %1128 = vmatprep.subr.mxu0 0.0
  %1129 = vmatpush2.msra.mxu0 0.0
  %1130 = vmatprep.subr.mxu0 0.0
  %1131 = vmatpush2.msra.mxu0 0.0
  %1132 = vmatprep.subr.mxu0 0.0
  %1133 = vmatpush2.msra.mxu0 0.0
  %1134 = vmatprep.subr.mxu0 0.0
  %1135 = vmatpush2.msra.mxu0 0.0
  %1136 = vmatprep.subr.mxu0 0.0
  %1137 = vmatpush2.msra.mxu0 0.0
  %1138 = vmatprep.subr.mxu0 0.0
  %1139 = vmatpush2.msra.mxu0 0.0
  %1140 = vmatprep.subr.mxu0 0.0
  %1141 = vmatpush2.msra.mxu0 0.0
  %1142 = vmatprep.subr.mxu0 0.0
  %1143 = vmatpush2.msra.mxu0 0.0
  %1144 = vmatprep.mubr.f32.mxu0 0.0
  %1145 = vmatmul.mubr.f32.gmra.mxu0 %v1071
  %v1146 = vpop.f32.mrf.mxu0
  %v1147 = vadd.f32 %v389, %v1146
  %v1148 = vpop.f32.mrf.mxu0
  %v1149 = vadd.f32 %v393, %v1148
  %1150 = vdwg.mxu0
  %1151 = vmatprep.subr.mxu0 0.0
  %1152 = vmatpush1.msra.mxu0 %v376
  %1153 = vmatprep.subr.mxu0 0.0
  %1154 = vmatpush1.msra.mxu0 %v373
  %1155 = vmatprep.subr.mxu0 0.0
  %1156 = vmatpush1.msra.mxu0 %v370
  %1157 = vmatprep.subr.mxu0 0.0
  %1158 = vmatpush1.msra.mxu0 %v367
  %1159 = vmatprep.subr.mxu0 0.0
  %1160 = vmatpush1.msra.mxu0 %v364
  %1161 = vmatprep.subr.mxu0 0.0
  %1162 = vmatpush1.msra.mxu0 %v361
  %1163 = vmatprep.subr.mxu0 0.0
  %1164 = vmatpush1.msra.mxu0 %v358
  %1165 = vmatprep.subr.mxu0 0.0
  %1166 = vmatpush1.msra.mxu0 %v355
  %1167 = vmatprep.subr.mxu0 0.0
  %1168 = vmatpush1.msra.mxu0 %v352
  %1169 = vmatprep.subr.mxu0 0.0
  %1170 = vmatpush1.msra.mxu0 %v349
  %1171 = vmatprep.subr.mxu0 0.0
  %1172 = vmatpush1.msra.mxu0 %v346
  %1173 = vmatprep.subr.mxu0 0.0
  %1174 = vmatpush1.msra.mxu0 %v343
  %1175 = vmatprep.subr.mxu0 0.0
  %1176 = vmatpush1.msra.mxu0 %v340
  %1177 = vmatprep.subr.mxu0 0.0
  %1178 = vmatpush1.msra.mxu0 %v337
  %1179 = vmatprep.subr.mxu0 0.0
  %1180 = vmatpush1.msra.mxu0 %v334
  %1181 = vmatprep.subr.mxu0 0.0
  %1182 = vmatpush1.msra.mxu0 %v331
  %1183 = vmatprep.subr.mxu0 0.0
  %1184 = vmatpush2.msra.mxu0 0.0
  %1185 = vmatprep.subr.mxu0 0.0
  %1186 = vmatpush2.msra.mxu0 0.0
  %1187 = vmatprep.subr.mxu0 0.0
  %1188 = vmatpush2.msra.mxu0 0.0
  %1189 = vmatprep.subr.mxu0 0.0
  %1190 = vmatpush2.msra.mxu0 0.0
  %1191 = vmatprep.subr.mxu0 0.0
  %1192 = vmatpush2.msra.mxu0 0.0
  %1193 = vmatprep.subr.mxu0 0.0
  %1194 = vmatpush2.msra.mxu0 0.0
  %1195 = vmatprep.subr.mxu0 0.0
  %1196 = vmatpush2.msra.mxu0 0.0
  %1197 = vmatprep.subr.mxu0 0.0
  %1198 = vmatpush2.msra.mxu0 0.0
  %1199 = vmatprep.subr.mxu0 0.0
  %1200 = vmatpush2.msra.mxu0 0.0
  %1201 = vmatprep.subr.mxu0 0.0
  %1202 = vmatpush2.msra.mxu0 0.0
  %1203 = vmatprep.subr.mxu0 0.0
  %1204 = vmatpush2.msra.mxu0 0.0
  %1205 = vmatprep.subr.mxu0 0.0
  %1206 = vmatpush2.msra.mxu0 0.0
  %1207 = vmatprep.subr.mxu0 0.0
  %1208 = vmatpush2.msra.mxu0 0.0
  %1209 = vmatprep.subr.mxu0 0.0
  %1210 = vmatpush2.msra.mxu0 0.0
  %1211 = vmatprep.subr.mxu0 0.0
  %1212 = vmatpush2.msra.mxu0 0.0
  %1213 = vmatprep.subr.mxu0 0.0
  %1214 = vmatpush2.msra.mxu0 0.0
  %1215 = vmatprep.mubr.f32.mxu0 0.0
  %1216 = vmatmul.mubr.f32.gmra.mxu0 %v1071
  %v1217 = vpop.f32.mrf.mxu0
  %v1218 = vadd.f32 %v397, %v1217
  %v1219 = vpop.f32.mrf.mxu0
  %1220 = vdwg.mxu0
  %v1221 = vadd.f32 %v1077, %v1147
  %v1222 = vxor.u32 %v1221, 2147483648
  %v1223 = vmul.f32 %v1222, 1.442695
  %v1224 = vpow.pop %v1223
  %v1225 = vadd.f32 %v1224, 1.0
  %v1226 = vrcp.pop %v1225
  %v1227 = vmul.f32 1.0, %v1226
  %v1228 = vadd.f32 %v1078, %v1149
  %v1229 = vxor.u32 %v1228, 2147483648
  %v1230 = vmul.f32 %v1229, 1.442695
  %v1231 = vpow.pop %v1230
  %v1232 = vadd.f32 %v1231, 1.0
  %v1233 = vrcp.pop %v1232
  %v1234 = vmul.f32 1.0, %v1233
  %v1235 = vmul.f32 %v1227, %v1218
  %v1236 = vadd.f32 %v1079, %v1235
  %v1237 = vtanh.pop %v1236
  %v1238 = vsub.f32 1.0, %v1234
  %v1239 = vmul.f32 %v1238, %v1237
  %v1240 = vmul.f32 %v1234, %v1071
  %v1241 = vadd.f32 %v1239, %v1240
  %s1242 = scalar_lea.vmem [#allocation3], 32
  %1243 = vst [vmem:[%s1242] sm:$0xff] %v1241
  %s1244 = smul.u32 5, 3
  %s1245 = smul.addr %s1244, 8
  %s1246 = scalar_lea.vmem [#allocation2], %s1245
  %v1247 = vld [vmem:[%s1246] sm:$0xff]
  %v1248 = vld [vmem:[%s1246 + $0x8] sm:$0xff]
  %v1249 = vld [vmem:[%s1246 + $0x10] sm:$0xff]
  %1250 = vmatprep.subr.mxu0 %v375
  %1251 = vmatpush1.msra.mxu0 %v374
  %1252 = vmatprep.subr.mxu0 %v372
  %1253 = vmatpush1.msra.mxu0 %v371
  %1254 = vmatprep.subr.mxu0 %v369
  %1255 = vmatpush1.msra.mxu0 %v368
  %1256 = vmatprep.subr.mxu0 %v366
  %1257 = vmatpush1.msra.mxu0 %v365
  %1258 = vmatprep.subr.mxu0 %v363
  %1259 = vmatpush1.msra.mxu0 %v362
  %1260 = vmatprep.subr.mxu0 %v360
  %1261 = vmatpush1.msra.mxu0 %v359
  %1262 = vmatprep.subr.mxu0 %v357
  %1263 = vmatpush1.msra.mxu0 %v356
  %1264 = vmatprep.subr.mxu0 %v354
  %1265 = vmatpush1.msra.mxu0 %v353
  %1266 = vmatprep.subr.mxu0 %v351
  %1267 = vmatpush1.msra.mxu0 %v350
  %1268 = vmatprep.subr.mxu0 %v348
  %1269 = vmatpush1.msra.mxu0 %v347
  %1270 = vmatprep.subr.mxu0 %v345
  %1271 = vmatpush1.msra.mxu0 %v344
  %1272 = vmatprep.subr.mxu0 %v342
  %1273 = vmatpush1.msra.mxu0 %v341
  %1274 = vmatprep.subr.mxu0 %v339
  %1275 = vmatpush1.msra.mxu0 %v338
  %1276 = vmatprep.subr.mxu0 %v336
  %1277 = vmatpush1.msra.mxu0 %v335
  %1278 = vmatprep.subr.mxu0 %v333
  %1279 = vmatpush1.msra.mxu0 %v332
  %1280 = vmatprep.subr.mxu0 %v330
  %1281 = vmatpush1.msra.mxu0 %v329
  %1282 = vmatprep.subr.mxu0 0.0
  %1283 = vmatpush2.msra.mxu0 0.0
  %1284 = vmatprep.subr.mxu0 0.0
  %1285 = vmatpush2.msra.mxu0 0.0
  %1286 = vmatprep.subr.mxu0 0.0
  %1287 = vmatpush2.msra.mxu0 0.0
  %1288 = vmatprep.subr.mxu0 0.0
  %1289 = vmatpush2.msra.mxu0 0.0
  %1290 = vmatprep.subr.mxu0 0.0
  %1291 = vmatpush2.msra.mxu0 0.0
  %1292 = vmatprep.subr.mxu0 0.0
  %1293 = vmatpush2.msra.mxu0 0.0
  %1294 = vmatprep.subr.mxu0 0.0
  %1295 = vmatpush2.msra.mxu0 0.0
  %1296 = vmatprep.subr.mxu0 0.0
  %1297 = vmatpush2.msra.mxu0 0.0
  %1298 = vmatprep.subr.mxu0 0.0
  %1299 = vmatpush2.msra.mxu0 0.0
  %1300 = vmatprep.subr.mxu0 0.0
  %1301 = vmatpush2.msra.mxu0 0.0
  %1302 = vmatprep.subr.mxu0 0.0
  %1303 = vmatpush2.msra.mxu0 0.0
  %1304 = vmatprep.subr.mxu0 0.0
  %1305 = vmatpush2.msra.mxu0 0.0
  %1306 = vmatprep.subr.mxu0 0.0
  %1307 = vmatpush2.msra.mxu0 0.0
  %1308 = vmatprep.subr.mxu0 0.0
  %1309 = vmatpush2.msra.mxu0 0.0
  %1310 = vmatprep.subr.mxu0 0.0
  %1311 = vmatpush2.msra.mxu0 0.0
  %1312 = vmatprep.subr.mxu0 0.0
  %1313 = vmatpush2.msra.mxu0 0.0
  %1314 = vmatprep.mubr.f32.mxu0 0.0
  %1315 = vmatmul.mubr.f32.gmra.mxu0 %v1241
  %v1316 = vpop.f32.mrf.mxu0
  %v1317 = vadd.f32 %v389, %v1316
  %v1318 = vpop.f32.mrf.mxu0
  %v1319 = vadd.f32 %v393, %v1318
  %1320 = vdwg.mxu0
  %1321 = vmatprep.subr.mxu0 0.0
  %1322 = vmatpush1.msra.mxu0 %v376
  %1323 = vmatprep.subr.mxu0 0.0
  %1324 = vmatpush1.msra.mxu0 %v373
  %1325 = vmatprep.subr.mxu0 0.0
  %1326 = vmatpush1.msra.mxu0 %v370
  %1327 = vmatprep.subr.mxu0 0.0
  %1328 = vmatpush1.msra.mxu0 %v367
  %1329 = vmatprep.subr.mxu0 0.0
  %1330 = vmatpush1.msra.mxu0 %v364
  %1331 = vmatprep.subr.mxu0 0.0
  %1332 = vmatpush1.msra.mxu0 %v361
  %1333 = vmatprep.subr.mxu0 0.0
  %1334 = vmatpush1.msra.mxu0 %v358
  %1335 = vmatprep.subr.mxu0 0.0
  %1336 = vmatpush1.msra.mxu0 %v355
  %1337 = vmatprep.subr.mxu0 0.0
  %1338 = vmatpush1.msra.mxu0 %v352
  %1339 = vmatprep.subr.mxu0 0.0
  %1340 = vmatpush1.msra.mxu0 %v349
  %1341 = vmatprep.subr.mxu0 0.0
  %1342 = vmatpush1.msra.mxu0 %v346
  %1343 = vmatprep.subr.mxu0 0.0
  %1344 = vmatpush1.msra.mxu0 %v343
  %1345 = vmatprep.subr.mxu0 0.0
  %1346 = vmatpush1.msra.mxu0 %v340
  %1347 = vmatprep.subr.mxu0 0.0
  %1348 = vmatpush1.msra.mxu0 %v337
  %1349 = vmatprep.subr.mxu0 0.0
  %1350 = vmatpush1.msra.mxu0 %v334
  %1351 = vmatprep.subr.mxu0 0.0
  %1352 = vmatpush1.msra.mxu0 %v331
  %1353 = vmatprep.subr.mxu0 0.0
  %1354 = vmatpush2.msra.mxu0 0.0
  %1355 = vmatprep.subr.mxu0 0.0
  %1356 = vmatpush2.msra.mxu0 0.0
  %1357 = vmatprep.subr.mxu0 0.0
  %1358 = vmatpush2.msra.mxu0 0.0
  %1359 = vmatprep.subr.mxu0 0.0
  %1360 = vmatpush2.msra.mxu0 0.0
  %1361 = vmatprep.subr.mxu0 0.0
  %1362 = vmatpush2.msra.mxu0 0.0
  %1363 = vmatprep.subr.mxu0 0.0
  %1364 = vmatpush2.msra.mxu0 0.0
  %1365 = vmatprep.subr.mxu0 0.0
  %1366 = vmatpush2.msra.mxu0 0.0
  %1367 = vmatprep.subr.mxu0 0.0
  %1368 = vmatpush2.msra.mxu0 0.0
  %1369 = vmatprep.subr.mxu0 0.0
  %1370 = vmatpush2.msra.mxu0 0.0
  %1371 = vmatprep.subr.mxu0 0.0
  %1372 = vmatpush2.msra.mxu0 0.0
  %1373 = vmatprep.subr.mxu0 0.0
  %1374 = vmatpush2.msra.mxu0 0.0
  %1375 = vmatprep.subr.mxu0 0.0
  %1376 = vmatpush2.msra.mxu0 0.0
  %1377 = vmatprep.subr.mxu0 0.0
  %1378 = vmatpush2.msra.mxu0 0.0
  %1379 = vmatprep.subr.mxu0 0.0
  %1380 = vmatpush2.msra.mxu0 0.0
  %1381 = vmatprep.subr.mxu0 0.0
  %1382 = vmatpush2.msra.mxu0 0.0
  %1383 = vmatprep.subr.mxu0 0.0
  %1384 = vmatpush2.msra.mxu0 0.0
  %1385 = vmatprep.mubr.f32.mxu0 0.0
  %1386 = vmatmul.mubr.f32.gmra.mxu0 %v1241
  %v1387 = vpop.f32.mrf.mxu0
  %v1388 = vadd.f32 %v397, %v1387
  %v1389 = vpop.f32.mrf.mxu0
  %1390 = vdwg.mxu0
  %v1391 = vadd.f32 %v1247, %v1317
  %v1392 = vxor.u32 %v1391, 2147483648
  %v1393 = vmul.f32 %v1392, 1.442695
  %v1394 = vpow.pop %v1393
  %v1395 = vadd.f32 %v1394, 1.0
  %v1396 = vrcp.pop %v1395
  %v1397 = vmul.f32 1.0, %v1396
  %v1398 = vadd.f32 %v1248, %v1319
  %v1399 = vxor.u32 %v1398, 2147483648
  %v1400 = vmul.f32 %v1399, 1.442695
  %v1401 = vpow.pop %v1400
  %v1402 = vadd.f32 %v1401, 1.0
  %v1403 = vrcp.pop %v1402
  %v1404 = vmul.f32 1.0, %v1403
  %v1405 = vmul.f32 %v1397, %v1388
  %v1406 = vadd.f32 %v1249, %v1405
  %v1407 = vtanh.pop %v1406
  %v1408 = vsub.f32 1.0, %v1404
  %v1409 = vmul.f32 %v1408, %v1407
  %v1410 = vmul.f32 %v1404, %v1241
  %v1411 = vadd.f32 %v1409, %v1410
  %s1412 = scalar_lea.vmem [#allocation3], 40
  %1413 = vst [vmem:[%s1412] sm:$0xff] %v1411
  %s1414 = smul.u32 6, 3
  %s1415 = smul.addr %s1414, 8
  %s1416 = scalar_lea.vmem [#allocation2], %s1415
  %v1417 = vld [vmem:[%s1416] sm:$0xff]
  %v1418 = vld [vmem:[%s1416 + $0x8] sm:$0xff]
  %v1419 = vld [vmem:[%s1416 + $0x10] sm:$0xff]
  %1420 = vmatprep.subr.mxu0 %v375
  %1421 = vmatpush1.msra.mxu0 %v374
  %1422 = vmatprep.subr.mxu0 %v372
  %1423 = vmatpush1.msra.mxu0 %v371
  %1424 = vmatprep.subr.mxu0 %v369
  %1425 = vmatpush1.msra.mxu0 %v368
  %1426 = vmatprep.subr.mxu0 %v366
  %1427 = vmatpush1.msra.mxu0 %v365
  %1428 = vmatprep.subr.mxu0 %v363
  %1429 = vmatpush1.msra.mxu0 %v362
  %1430 = vmatprep.subr.mxu0 %v360
  %1431 = vmatpush1.msra.mxu0 %v359
  %1432 = vmatprep.subr.mxu0 %v357
  %1433 = vmatpush1.msra.mxu0 %v356
  %1434 = vmatprep.subr.mxu0 %v354
  %1435 = vmatpush1.msra.mxu0 %v353
  %1436 = vmatprep.subr.mxu0 %v351
  %1437 = vmatpush1.msra.mxu0 %v350
  %1438 = vmatprep.subr.mxu0 %v348
  %1439 = vmatpush1.msra.mxu0 %v347
  %1440 = vmatprep.subr.mxu0 %v345
  %1441 = vmatpush1.msra.mxu0 %v344
  %1442 = vmatprep.subr.mxu0 %v342
  %1443 = vmatpush1.msra.mxu0 %v341
  %1444 = vmatprep.subr.mxu0 %v339
  %1445 = vmatpush1.msra.mxu0 %v338
  %1446 = vmatprep.subr.mxu0 %v336
  %1447 = vmatpush1.msra.mxu0 %v335
  %1448 = vmatprep.subr.mxu0 %v333
  %1449 = vmatpush1.msra.mxu0 %v332
  %1450 = vmatprep.subr.mxu0 %v330
  %1451 = vmatpush1.msra.mxu0 %v329
  %1452 = vmatprep.subr.mxu0 0.0
  %1453 = vmatpush2.msra.mxu0 0.0
  %1454 = vmatprep.subr.mxu0 0.0
  %1455 = vmatpush2.msra.mxu0 0.0
  %1456 = vmatprep.subr.mxu0 0.0
  %1457 = vmatpush2.msra.mxu0 0.0
  %1458 = vmatprep.subr.mxu0 0.0
  %1459 = vmatpush2.msra.mxu0 0.0
  %1460 = vmatprep.subr.mxu0 0.0
  %1461 = vmatpush2.msra.mxu0 0.0
  %1462 = vmatprep.subr.mxu0 0.0
  %1463 = vmatpush2.msra.mxu0 0.0
  %1464 = vmatprep.subr.mxu0 0.0
  %1465 = vmatpush2.msra.mxu0 0.0
  %1466 = vmatprep.subr.mxu0 0.0
  %1467 = vmatpush2.msra.mxu0 0.0
  %1468 = vmatprep.subr.mxu0 0.0
  %1469 = vmatpush2.msra.mxu0 0.0
  %1470 = vmatprep.subr.mxu0 0.0
  %1471 = vmatpush2.msra.mxu0 0.0
  %1472 = vmatprep.subr.mxu0 0.0
  %1473 = vmatpush2.msra.mxu0 0.0
  %1474 = vmatprep.subr.mxu0 0.0
  %1475 = vmatpush2.msra.mxu0 0.0
  %1476 = vmatprep.subr.mxu0 0.0
  %1477 = vmatpush2.msra.mxu0 0.0
  %1478 = vmatprep.subr.mxu0 0.0
  %1479 = vmatpush2.msra.mxu0 0.0
  %1480 = vmatprep.subr.mxu0 0.0
  %1481 = vmatpush2.msra.mxu0 0.0
  %1482 = vmatprep.subr.mxu0 0.0
  %1483 = vmatpush2.msra.mxu0 0.0
  %1484 = vmatprep.mubr.f32.mxu0 0.0
  %1485 = vmatmul.mubr.f32.gmra.mxu0 %v1411
  %v1486 = vpop.f32.mrf.mxu0
  %v1487 = vadd.f32 %v389, %v1486
  %v1488 = vpop.f32.mrf.mxu0
  %v1489 = vadd.f32 %v393, %v1488
  %1490 = vdwg.mxu0
  %1491 = vmatprep.subr.mxu0 0.0
  %1492 = vmatpush1.msra.mxu0 %v376
  %1493 = vmatprep.subr.mxu0 0.0
  %1494 = vmatpush1.msra.mxu0 %v373
  %1495 = vmatprep.subr.mxu0 0.0
  %1496 = vmatpush1.msra.mxu0 %v370
  %1497 = vmatprep.subr.mxu0 0.0
  %1498 = vmatpush1.msra.mxu0 %v367
  %1499 = vmatprep.subr.mxu0 0.0
  %1500 = vmatpush1.msra.mxu0 %v364
  %1501 = vmatprep.subr.mxu0 0.0
  %1502 = vmatpush1.msra.mxu0 %v361
  %1503 = vmatprep.subr.mxu0 0.0
  %1504 = vmatpush1.msra.mxu0 %v358
  %1505 = vmatprep.subr.mxu0 0.0
  %1506 = vmatpush1.msra.mxu0 %v355
  %1507 = vmatprep.subr.mxu0 0.0
  %1508 = vmatpush1.msra.mxu0 %v352
  %1509 = vmatprep.subr.mxu0 0.0
  %1510 = vmatpush1.msra.mxu0 %v349
  %1511 = vmatprep.subr.mxu0 0.0
  %1512 = vmatpush1.msra.mxu0 %v346
  %1513 = vmatprep.subr.mxu0 0.0
  %1514 = vmatpush1.msra.mxu0 %v343
  %1515 = vmatprep.subr.mxu0 0.0
  %1516 = vmatpush1.msra.mxu0 %v340
  %1517 = vmatprep.subr.mxu0 0.0
  %1518 = vmatpush1.msra.mxu0 %v337
  %1519 = vmatprep.subr.mxu0 0.0
  %1520 = vmatpush1.msra.mxu0 %v334
  %1521 = vmatprep.subr.mxu0 0.0
  %1522 = vmatpush1.msra.mxu0 %v331
  %1523 = vmatprep.subr.mxu0 0.0
  %1524 = vmatpush2.msra.mxu0 0.0
  %1525 = vmatprep.subr.mxu0 0.0
  %1526 = vmatpush2.msra.mxu0 0.0
  %1527 = vmatprep.subr.mxu0 0.0
  %1528 = vmatpush2.msra.mxu0 0.0
  %1529 = vmatprep.subr.mxu0 0.0
  %1530 = vmatpush2.msra.mxu0 0.0
  %1531 = vmatprep.subr.mxu0 0.0
  %1532 = vmatpush2.msra.mxu0 0.0
  %1533 = vmatprep.subr.mxu0 0.0
  %1534 = vmatpush2.msra.mxu0 0.0
  %1535 = vmatprep.subr.mxu0 0.0
  %1536 = vmatpush2.msra.mxu0 0.0
  %1537 = vmatprep.subr.mxu0 0.0
  %1538 = vmatpush2.msra.mxu0 0.0
  %1539 = vmatprep.subr.mxu0 0.0
  %1540 = vmatpush2.msra.mxu0 0.0
  %1541 = vmatprep.subr.mxu0 0.0
  %1542 = vmatpush2.msra.mxu0 0.0
  %1543 = vmatprep.subr.mxu0 0.0
  %1544 = vmatpush2.msra.mxu0 0.0
  %1545 = vmatprep.subr.mxu0 0.0
  %1546 = vmatpush2.msra.mxu0 0.0
  %1547 = vmatprep.subr.mxu0 0.0
  %1548 = vmatpush2.msra.mxu0 0.0
  %1549 = vmatprep.subr.mxu0 0.0
  %1550 = vmatpush2.msra.mxu0 0.0
  %1551 = vmatprep.subr.mxu0 0.0
  %1552 = vmatpush2.msra.mxu0 0.0
  %1553 = vmatprep.subr.mxu0 0.0
  %1554 = vmatpush2.msra.mxu0 0.0
  %1555 = vmatprep.mubr.f32.mxu0 0.0
  %1556 = vmatmul.mubr.f32.gmra.mxu0 %v1411
  %v1557 = vpop.f32.mrf.mxu0
  %v1558 = vadd.f32 %v397, %v1557
  %v1559 = vpop.f32.mrf.mxu0
  %1560 = vdwg.mxu0
  %v1561 = vadd.f32 %v1417, %v1487
  %v1562 = vxor.u32 %v1561, 2147483648
  %v1563 = vmul.f32 %v1562, 1.442695
  %v1564 = vpow.pop %v1563
  %v1565 = vadd.f32 %v1564, 1.0
  %v1566 = vrcp.pop %v1565
  %v1567 = vmul.f32 1.0, %v1566
  %v1568 = vadd.f32 %v1418, %v1489
  %v1569 = vxor.u32 %v1568, 2147483648
  %v1570 = vmul.f32 %v1569, 1.442695
  %v1571 = vpow.pop %v1570
  %v1572 = vadd.f32 %v1571, 1.0
  %v1573 = vrcp.pop %v1572
  %v1574 = vmul.f32 1.0, %v1573
  %v1575 = vmul.f32 %v1567, %v1558
  %v1576 = vadd.f32 %v1419, %v1575
  %v1577 = vtanh.pop %v1576
  %v1578 = vsub.f32 1.0, %v1574
  %v1579 = vmul.f32 %v1578, %v1577
  %v1580 = vmul.f32 %v1574, %v1411
  %v1581 = vadd.f32 %v1579, %v1580
  %s1582 = scalar_lea.vmem [#allocation3], 48
  %1583 = vst [vmem:[%s1582] sm:$0xff] %v1581
  %s1584 = smul.u32 7, 3
  %s1585 = smul.addr %s1584, 8
  %s1586 = scalar_lea.vmem [#allocation2], %s1585
  %v1587 = vld [vmem:[%s1586] sm:$0xff]
  %v1588 = vld [vmem:[%s1586 + $0x8] sm:$0xff]
  %v1589 = vld [vmem:[%s1586 + $0x10] sm:$0xff]
  %1590 = vmatprep.subr.mxu0 %v375
  %1591 = vmatpush1.msra.mxu0 %v374
  %1592 = vmatprep.subr.mxu0 %v372
  %1593 = vmatpush1.msra.mxu0 %v371
  %1594 = vmatprep.subr.mxu0 %v369
  %1595 = vmatpush1.msra.mxu0 %v368
  %1596 = vmatprep.subr.mxu0 %v366
  %1597 = vmatpush1.msra.mxu0 %v365
  %1598 = vmatprep.subr.mxu0 %v363
  %1599 = vmatpush1.msra.mxu0 %v362
  %1600 = vmatprep.subr.mxu0 %v360
  %1601 = vmatpush1.msra.mxu0 %v359
  %1602 = vmatprep.subr.mxu0 %v357
  %1603 = vmatpush1.msra.mxu0 %v356
  %1604 = vmatprep.subr.mxu0 %v354
  %1605 = vmatpush1.msra.mxu0 %v353
  %1606 = vmatprep.subr.mxu0 %v351
  %1607 = vmatpush1.msra.mxu0 %v350
  %1608 = vmatprep.subr.mxu0 %v348
  %1609 = vmatpush1.msra.mxu0 %v347
  %1610 = vmatprep.subr.mxu0 %v345
  %1611 = vmatpush1.msra.mxu0 %v344
  %1612 = vmatprep.subr.mxu0 %v342
  %1613 = vmatpush1.msra.mxu0 %v341
  %1614 = vmatprep.subr.mxu0 %v339
  %1615 = vmatpush1.msra.mxu0 %v338
  %1616 = vmatprep.subr.mxu0 %v336
  %1617 = vmatpush1.msra.mxu0 %v335
  %1618 = vmatprep.subr.mxu0 %v333
  %1619 = vmatpush1.msra.mxu0 %v332
  %1620 = vmatprep.subr.mxu0 %v330
  %1621 = vmatpush1.msra.mxu0 %v329
  %1622 = vmatprep.subr.mxu0 0.0
  %1623 = vmatpush2.msra.mxu0 0.0
  %1624 = vmatprep.subr.mxu0 0.0
  %1625 = vmatpush2.msra.mxu0 0.0
  %1626 = vmatprep.subr.mxu0 0.0
  %1627 = vmatpush2.msra.mxu0 0.0
  %1628 = vmatprep.subr.mxu0 0.0
  %1629 = vmatpush2.msra.mxu0 0.0
  %1630 = vmatprep.subr.mxu0 0.0
  %1631 = vmatpush2.msra.mxu0 0.0
  %1632 = vmatprep.subr.mxu0 0.0
  %1633 = vmatpush2.msra.mxu0 0.0
  %1634 = vmatprep.subr.mxu0 0.0
  %1635 = vmatpush2.msra.mxu0 0.0
  %1636 = vmatprep.subr.mxu0 0.0
  %1637 = vmatpush2.msra.mxu0 0.0
  %1638 = vmatprep.subr.mxu0 0.0
  %1639 = vmatpush2.msra.mxu0 0.0
  %1640 = vmatprep.subr.mxu0 0.0
  %1641 = vmatpush2.msra.mxu0 0.0
  %1642 = vmatprep.subr.mxu0 0.0
  %1643 = vmatpush2.msra.mxu0 0.0
  %1644 = vmatprep.subr.mxu0 0.0
  %1645 = vmatpush2.msra.mxu0 0.0
  %1646 = vmatprep.subr.mxu0 0.0
  %1647 = vmatpush2.msra.mxu0 0.0
  %1648 = vmatprep.subr.mxu0 0.0
  %1649 = vmatpush2.msra.mxu0 0.0
  %1650 = vmatprep.subr.mxu0 0.0
  %1651 = vmatpush2.msra.mxu0 0.0
  %1652 = vmatprep.subr.mxu0 0.0
  %1653 = vmatpush2.msra.mxu0 0.0
  %1654 = vmatprep.mubr.f32.mxu0 0.0
  %1655 = vmatmul.mubr.f32.gmra.mxu0 %v1581
  %v1656 = vpop.f32.mrf.mxu0
  %v1657 = vadd.f32 %v389, %v1656
  %v1658 = vpop.f32.mrf.mxu0
  %v1659 = vadd.f32 %v393, %v1658
  %1660 = vdwg.mxu0
  %1661 = vmatprep.subr.mxu0 0.0
  %1662 = vmatpush1.msra.mxu0 %v376
  %1663 = vmatprep.subr.mxu0 0.0
  %1664 = vmatpush1.msra.mxu0 %v373
  %1665 = vmatprep.subr.mxu0 0.0
  %1666 = vmatpush1.msra.mxu0 %v370
  %1667 = vmatprep.subr.mxu0 0.0
  %1668 = vmatpush1.msra.mxu0 %v367
  %1669 = vmatprep.subr.mxu0 0.0
  %1670 = vmatpush1.msra.mxu0 %v364
  %1671 = vmatprep.subr.mxu0 0.0
  %1672 = vmatpush1.msra.mxu0 %v361
  %1673 = vmatprep.subr.mxu0 0.0
  %1674 = vmatpush1.msra.mxu0 %v358
  %1675 = vmatprep.subr.mxu0 0.0
  %1676 = vmatpush1.msra.mxu0 %v355
  %1677 = vmatprep.subr.mxu0 0.0
  %1678 = vmatpush1.msra.mxu0 %v352
  %1679 = vmatprep.subr.mxu0 0.0
  %1680 = vmatpush1.msra.mxu0 %v349
  %1681 = vmatprep.subr.mxu0 0.0
  %1682 = vmatpush1.msra.mxu0 %v346
  %1683 = vmatprep.subr.mxu0 0.0
  %1684 = vmatpush1.msra.mxu0 %v343
  %1685 = vmatprep.subr.mxu0 0.0
  %1686 = vmatpush1.msra.mxu0 %v340
  %1687 = vmatprep.subr.mxu0 0.0
  %1688 = vmatpush1.msra.mxu0 %v337
  %1689 = vmatprep.subr.mxu0 0.0
  %1690 = vmatpush1.msra.mxu0 %v334
  %1691 = vmatprep.subr.mxu0 0.0
  %1692 = vmatpush1.msra.mxu0 %v331
  %1693 = vmatprep.subr.mxu0 0.0
  %1694 = vmatpush2.msra.mxu0 0.0
  %1695 = vmatprep.subr.mxu0 0.0
  %1696 = vmatpush2.msra.mxu0 0.0
  %1697 = vmatprep.subr.mxu0 0.0
  %1698 = vmatpush2.msra.mxu0 0.0
  %1699 = vmatprep.subr.mxu0 0.0
  %1700 = vmatpush2.msra.mxu0 0.0
  %1701 = vmatprep.subr.mxu0 0.0
  %1702 = vmatpush2.msra.mxu0 0.0
  %1703 = vmatprep.subr.mxu0 0.0
  %1704 = vmatpush2.msra.mxu0 0.0
  %1705 = vmatprep.subr.mxu0 0.0
  %1706 = vmatpush2.msra.mxu0 0.0
  %1707 = vmatprep.subr.mxu0 0.0
  %1708 = vmatpush2.msra.mxu0 0.0
  %1709 = vmatprep.subr.mxu0 0.0
  %1710 = vmatpush2.msra.mxu0 0.0
  %1711 = vmatprep.subr.mxu0 0.0
  %1712 = vmatpush2.msra.mxu0 0.0
  %1713 = vmatprep.subr.mxu0 0.0
  %1714 = vmatpush2.msra.mxu0 0.0
  %1715 = vmatprep.subr.mxu0 0.0
  %1716 = vmatpush2.msra.mxu0 0.0
  %1717 = vmatprep.subr.mxu0 0.0
  %1718 = vmatpush2.msra.mxu0 0.0
  %1719 = vmatprep.subr.mxu0 0.0
  %1720 = vmatpush2.msra.mxu0 0.0
  %1721 = vmatprep.subr.mxu0 0.0
  %1722 = vmatpush2.msra.mxu0 0.0
  %1723 = vmatprep.subr.mxu0 0.0
  %1724 = vmatpush2.msra.mxu0 0.0
  %1725 = vmatprep.mubr.f32.mxu0 0.0
  %1726 = vmatmul.mubr.f32.gmra.mxu0 %v1581
  %v1727 = vpop.f32.mrf.mxu0
  %v1728 = vadd.f32 %v397, %v1727
  %v1729 = vpop.f32.mrf.mxu0
  %1730 = vdwg.mxu0
  %v1731 = vadd.f32 %v1587, %v1657
  %v1732 = vxor.u32 %v1731, 2147483648
  %v1733 = vmul.f32 %v1732, 1.442695
  %v1734 = vpow.pop %v1733
  %v1735 = vadd.f32 %v1734, 1.0
  %v1736 = vrcp.pop %v1735
  %v1737 = vmul.f32 1.0, %v1736
  %v1738 = vadd.f32 %v1588, %v1659
  %v1739 = vxor.u32 %v1738, 2147483648
  %v1740 = vmul.f32 %v1739, 1.442695
  %v1741 = vpow.pop %v1740
  %v1742 = vadd.f32 %v1741, 1.0
  %v1743 = vrcp.pop %v1742
  %v1744 = vmul.f32 1.0, %v1743
  %v1745 = vmul.f32 %v1737, %v1728
  %v1746 = vadd.f32 %v1589, %v1745
  %v1747 = vtanh.pop %v1746
  %v1748 = vsub.f32 1.0, %v1744
  %v1749 = vmul.f32 %v1748, %v1747
  %v1750 = vmul.f32 %v1744, %v1581
  %v1751 = vadd.f32 %v1749, %v1750
  %s1752 = scalar_lea.vmem [#allocation3], 56
  %1753 = vst [vmem:[%s1752] sm:$0xff] %v1751
  %1754 = vst [vmem:[%s9] sm:$0xff] %v1751
  %v1755 = vld [vmem:[#allocation3] sm:$0xff]
  %v1756 = vld [vmem:[#allocation3 + $0x8] sm:$0xff]
  %v1757 = vld [vmem:[#allocation3 + $0x10] sm:$0xff]
  %v1758 = vld [vmem:[#allocation3 + $0x18] sm:$0xff]
  %v1759 = vld [vmem:[#allocation3 + $0x20] sm:$0xff]
  %v1760 = vld [vmem:[#allocation3 + $0x28] sm:$0xff]
  %v1761 = vld [vmem:[#allocation3 + $0x30] sm:$0xff]
  %v1762 = vld [vmem:[#allocation3 + $0x38] sm:$0xff]
  %v1763 = vld [vmem:[%s6] sm:$0xff]
  %v1764 = vld [vmem:[%s6 + $0x8] sm:$0xff]
  %v1765 = vld [vmem:[%s6 + $0x10] sm:$0xff]
  %v1766 = vld [vmem:[%s6 + $0x18] sm:$0xff]
  %v1767 = vld [vmem:[%s6 + $0x20] sm:$0xff]
  %v1768 = vld [vmem:[%s6 + $0x28] sm:$0xff]
  %v1769 = vld [vmem:[%s6 + $0x30] sm:$0xff]
  %v1770 = vld [vmem:[%s6 + $0x38] sm:$0xff]
  %v1771 = vld [vmem:[%s6 + $0x40] sm:$0xff]
  %v1772 = vld [vmem:[%s6 + $0x48] sm:$0xff]
  %v1773 = vld [vmem:[%s6 + $0x50] sm:$0xff]
  %v1774 = vld [vmem:[%s6 + $0x58] sm:$0xff]
  %v1775 = vld [vmem:[%s6 + $0x60] sm:$0xff]
  %v1776 = vld [vmem:[%s6 + $0x68] sm:$0xff]
  %v1777 = vld [vmem:[%s6 + $0x70] sm:$0xff]
  %v1778 = vld [vmem:[%s6 + $0x78] sm:$0xff]
  %v1779 = vld [vmem:[%s7] sm:$0x1]
  %v1781 = vlaneseq
  %v1782 = vshrl.u32 %v1781, 7
  %v1783 = vsub.s32 0, %v1782
  %v1784 = vrot.slane %v1779, %v1783
  %1786 = vmatprep.subr.mxu0 0.0
  %1787 = vmatpush1.msra.mxu0 %v1778
  %1788 = vmatprep.subr.mxu0 0.0
  %1789 = vmatpush1.msra.mxu0 %v1777
  %1790 = vmatprep.subr.mxu0 0.0
  %1791 = vmatpush1.msra.mxu0 %v1776
  %1792 = vmatprep.subr.mxu0 0.0
  %1793 = vmatpush1.msra.mxu0 %v1775
  %1794 = vmatprep.subr.mxu0 0.0
  %1795 = vmatpush1.msra.mxu0 %v1774
  %1796 = vmatprep.subr.mxu0 0.0
  %1797 = vmatpush1.msra.mxu0 %v1773
  %1798 = vmatprep.subr.mxu0 0.0
  %1799 = vmatpush1.msra.mxu0 %v1772
  %1800 = vmatprep.subr.mxu0 0.0
  %1801 = vmatpush1.msra.mxu0 %v1771
  %1802 = vmatprep.subr.mxu0 0.0
  %1803 = vmatpush1.msra.mxu0 %v1770
  %1804 = vmatprep.subr.mxu0 0.0
  %1805 = vmatpush1.msra.mxu0 %v1769
  %1806 = vmatprep.subr.mxu0 0.0
  %1807 = vmatpush1.msra.mxu0 %v1768
  %1808 = vmatprep.subr.mxu0 0.0
  %1809 = vmatpush1.msra.mxu0 %v1767
  %1810 = vmatprep.subr.mxu0 0.0
  %1811 = vmatpush1.msra.mxu0 %v1766
  %1812 = vmatprep.subr.mxu0 0.0
  %1813 = vmatpush1.msra.mxu0 %v1765
  %1814 = vmatprep.subr.mxu0 0.0
  %1815 = vmatpush1.msra.mxu0 %v1764
  %1816 = vmatprep.subr.mxu0 0.0
  %1817 = vmatpush1.msra.mxu0 %v1763
  %1818 = vmatprep.subr.mxu0 0.0
  %1819 = vmatpush2.msra.mxu0 0.0
  %1820 = vmatprep.subr.mxu0 0.0
  %1821 = vmatpush2.msra.mxu0 0.0
  %1822 = vmatprep.subr.mxu0 0.0
  %1823 = vmatpush2.msra.mxu0 0.0
  %1824 = vmatprep.subr.mxu0 0.0
  %1825 = vmatpush2.msra.mxu0 0.0
  %1826 = vmatprep.subr.mxu0 0.0
  %1827 = vmatpush2.msra.mxu0 0.0
  %1828 = vmatprep.subr.mxu0 0.0
  %1829 = vmatpush2.msra.mxu0 0.0
  %1830 = vmatprep.subr.mxu0 0.0
  %1831 = vmatpush2.msra.mxu0 0.0
  %1832 = vmatprep.subr.mxu0 0.0
  %1833 = vmatpush2.msra.mxu0 0.0
  %1834 = vmatprep.subr.mxu0 0.0
  %1835 = vmatpush2.msra.mxu0 0.0
  %1836 = vmatprep.subr.mxu0 0.0
  %1837 = vmatpush2.msra.mxu0 0.0
  %1838 = vmatprep.subr.mxu0 0.0
  %1839 = vmatpush2.msra.mxu0 0.0
  %1840 = vmatprep.subr.mxu0 0.0
  %1841 = vmatpush2.msra.mxu0 0.0
  %1842 = vmatprep.subr.mxu0 0.0
  %1843 = vmatpush2.msra.mxu0 0.0
  %1844 = vmatprep.subr.mxu0 0.0
  %1845 = vmatpush2.msra.mxu0 0.0
  %1846 = vmatprep.subr.mxu0 0.0
  %1847 = vmatpush2.msra.mxu0 0.0
  %1848 = vmatprep.subr.mxu0 0.0
  %1849 = vmatpush2.msra.mxu0 0.0
  %1850 = vmatprep.mubr.f32.mxu0 0.0
  %1851 = vmatmul.mubr.f32.gmra.mxu0 %v1755
  %v1852 = vpop.f32.mrf.mxu0
  %v1853 = vadd.f32 %v1784, %v1852
  %v1854 = vpop.f32.mrf.mxu0
  %1855 = vmatprep.mubr.f32.mxu0 0.0
  %1856 = vmatmul.mubr.f32.gmra.mxu0 %v1756
  %v1857 = vpop.f32.mrf.mxu0
  %v1858 = vadd.f32 %v1784, %v1857
  %v1859 = vpop.f32.mrf.mxu0
  %1860 = vmatprep.mubr.f32.mxu0 0.0
  %1861 = vmatmul.mubr.f32.gmra.mxu0 %v1757
  %v1862 = vpop.f32.mrf.mxu0
  %v1863 = vadd.f32 %v1784, %v1862
  %v1864 = vpop.f32.mrf.mxu0
  %1865 = vmatprep.mubr.f32.mxu0 0.0
  %1866 = vmatmul.mubr.f32.gmra.mxu0 %v1758
  %v1867 = vpop.f32.mrf.mxu0
  %v1868 = vadd.f32 %v1784, %v1867
  %v1869 = vpop.f32.mrf.mxu0
  %1870 = vmatprep.mubr.f32.mxu0 0.0
  %1871 = vmatmul.mubr.f32.gmra.mxu0 %v1759
  %v1872 = vpop.f32.mrf.mxu0
  %v1873 = vadd.f32 %v1784, %v1872
  %v1874 = vpop.f32.mrf.mxu0
  %1875 = vmatprep.mubr.f32.mxu0 0.0
  %1876 = vmatmul.mubr.f32.gmra.mxu0 %v1760
  %v1877 = vpop.f32.mrf.mxu0
  %v1878 = vadd.f32 %v1784, %v1877
  %v1879 = vpop.f32.mrf.mxu0
  %1880 = vmatprep.mubr.f32.mxu0 0.0
  %1881 = vmatmul.mubr.f32.gmra.mxu0 %v1761
  %v1882 = vpop.f32.mrf.mxu0
  %v1883 = vadd.f32 %v1784, %v1882
  %v1884 = vpop.f32.mrf.mxu0
  %1885 = vmatprep.mubr.f32.mxu0 0.0
  %1886 = vmatmul.mubr.f32.gmra.mxu0 %v1762
  %v1887 = vpop.f32.mrf.mxu0
  %v1888 = vadd.f32 %v1784, %v1887
  %v1889 = vpop.f32.mrf.mxu0
  %1890 = vdwg.mxu0
  %1891 = vst [vmem:[%s8] sm:$0xff] %v1853
  %1892 = vst [vmem:[%s8 + $0x8] sm:$0xff] %v1858
  %1893 = vst [vmem:[%s8 + $0x10] sm:$0xff] %v1863
  %1894 = vst [vmem:[%s8 + $0x18] sm:$0xff] %v1868
  %1895 = vst [vmem:[%s8 + $0x20] sm:$0xff] %v1873
  %1896 = vst [vmem:[%s8 + $0x28] sm:$0xff] %v1878
  %1897 = vst [vmem:[%s8 + $0x30] sm:$0xff] %v1883
  %1898 = vst [vmem:[%s8 + $0x38] sm:$0xff] %v1888
  // Predicated region
  $region34: #{decoder_forward.1} parent=0 // pred_check
    _
  $region35: #{decoder_forward.1} parent=0 // pred_check_branch
    %1900 = sbr.rel (0) target = $region37
  $region36: #{decoder_forward.1} parent=0 // pred_region
    _
  $region37: #{decoder_forward.1} parent=0 // pred_fallthru
    _
  // Predicated region
  $region38: #{decoder_forward.1} parent=0 // pred_check
    _
  $region39: #{decoder_forward.1} parent=0 // pred_check_branch
    %1902 = sbr.rel (0) target = $region41
  $region40: #{decoder_forward.1} parent=0 // pred_region
    _
  $region41: #{decoder_forward.1} parent=0 // pred_fallthru
    _
  // Predicated region
  $region42: #{decoder_forward.1} parent=0 // pred_check
    _
  $region43: #{decoder_forward.1} parent=0 // pred_check_branch
    %1904 = sbr.rel (0) target = $region45
  $region44: #{decoder_forward.1} parent=0 // pred_region
    _
  $region45: #{decoder_forward.1} parent=0 // pred_fallthru
    _
  // Predicated region
  $region46: #{decoder_forward.1} parent=0 // pred_check
    _
  $region47: #{decoder_forward.1} parent=0 // pred_check_branch
    %1906 = sbr.rel (0) target = $region49
  $region48: #{decoder_forward.1} parent=0 // pred_region
    _
  $region49: #{decoder_forward.1} parent=0 // pred_fallthru
    _

</llo_original>
